<compile_context>
chip_gen: v7x
topology: tpu7x:2x2x1
jax: 0.10.0
libtpu: 0.0.40
codegen_flags: <defaults>
</compile_context>

<pallas_src>
import functools

import jax
import jax.numpy as jnp
from jax.experimental import pallas as pl
from jax.experimental.pallas import tpu as pltpu

BN_EPS = 1e-5


def _down_kernel(xw_ref, w1_ref, s1_ref, b1_ref, w2_ref, s2_ref, b2_ref,
                 o_ref, im1_ref, im2_ref, *, wo):
    # xw_ref: (1, 1, 4, (TH+4)*Wo, Cin) bf16 -- 4 pooling-window elements, rows
    #         row-major flattened over (pooled rows incl. 2-row halo, Wo)
    # w*_ref: (3, 3*C, Cout) bf16 -- per-kh weights, lanes = [kw=1 | kw=0 | kw=2] x C
    # s*/b*_ref: (1, C) f32 -- folded BatchNorm scale / bias
    # o_ref: (1, TH*Wo, Cout) f32
    # im*_ref: bf16 "im2col over dx" scratch slabs
    _, _, _, R1, Cin = xw_ref.shape
    Cmid = w1_ref.shape[-1]
    TH = R1 // wo - 4
    M1 = (TH + 2) * wo          # conv1 outputs = h1 rows (incl. 1-row halo for conv2)
    R2 = M1
    M2 = TH * wo                # conv2 / tile outputs
    j = pl.program_id(1)
    f32 = jnp.float32

    # ---- MaxPool2d(2): elementwise max over the four 2x2-window elements ----
    xw = xw_ref[0, 0]                                           # (4, R1, Cin) bf16
    pooled = jnp.maximum(jnp.maximum(xw[0], xw[1]),
                         jnp.maximum(xw[2], xw[3]))             # (R1, Cin)

    def build_im2col(im_ref, data, c):
        # im_ref: (rows, 3*c); data: (rows, c) bf16
        # lanes [0:c)   = centre pixel          (kw = 1)
        # lanes [c:2c)  = left neighbour (w-1)  (kw = 0), zero at w == 0
        # lanes [2c:3c) = right neighbour (w+1) (kw = 2), zero at w == Wo-1
        rows = data.shape[0]
        col = jax.lax.broadcasted_iota(jnp.int32, (rows, 1), 0) % wo
        im_ref[:, 0:c] = data
        left_src = jnp.where(col == wo - 1, 0, data)   # col Wo-1 never a valid left nbr
        im_ref[1:rows, c:2 * c] = left_src[0:rows - 1]
        im_ref[0:1, c:2 * c] = jnp.zeros((1, c), data.dtype)
        right_src = jnp.where(col == 0, 0, data)       # col 0 never a valid right nbr
        im_ref[0:rows - 1, 2 * c:3 * c] = right_src[1:rows]
        im_ref[rows - 1:rows, 2 * c:3 * c] = jnp.zeros((1, c), data.dtype)

    def conv3x3(im_ref, w_ref, m):
        # dx folded into K (= 3*C); dy (kh) taps are aligned row-offset views.
        acc = jnp.dot(im_ref[0:m, :], w_ref[0], preferred_element_type=f32)
        acc += jnp.dot(im_ref[wo:wo + m, :], w_ref[1], preferred_element_type=f32)
        acc += jnp.dot(im_ref[2 * wo:2 * wo + m, :], w_ref[2], preferred_element_type=f32)
        return acc

    # ---- conv1 (pad=1, no bias) + folded BN1 + ReLU (f32) ----
    build_im2col(im1_ref, pooled, Cin)
    h1 = jnp.maximum(conv3x3(im1_ref, w1_ref, M1) * s1_ref[...] + b1_ref[...], 0.0)

    # ---- conv2 (pad=1, no bias) + folded BN2 + ReLU ----
    build_im2col(im2_ref, h1.astype(jnp.bfloat16), Cmid)

    # conv2's zero padding at the image top/bottom: the h1 halo row is only zero when
    # this row tile touches the image edge (interior tiles keep the true neighbour row).
    @pl.when(j == 0)
    def _():
        im2_ref[0:wo, :] = jnp.zeros((wo, 3 * Cmid), jnp.bfloat16)

    @pl.when(j == pl.num_programs(1) - 1)
    def _():
        im2_ref[R2 - wo:R2, :] = jnp.zeros((wo, 3 * Cmid), jnp.bfloat16)

    h2 = jnp.maximum(conv3x3(im2_ref, w2_ref, M2) * s2_ref[...] + b2_ref[...], 0.0)
    o_ref[0] = h2.astype(o_ref.dtype)


def down_forward(x_nchw, params):
    N, Cin, H, W = x_nchw.shape
    assert H % 2 == 0 and W % 2 == 0
    Ho, Wo = H // 2, W // 2
    assert Wo % 8 == 0, "pooled width must be a multiple of 8 (sublane-aligned rows)"
    w1, w2 = params["w1"], params["w2"]   # PyTorch OIHW
    Cmid, Cout = w1.shape[0], w2.shape[0]
    out_dtype = x_nchw.dtype

    # ---- layout prep only (bf16 halves the unavoidable NCHW->NHWC HBM pass; max()
    # commutes with the monotone bf16 rounding, so pooling results are unchanged) ----
    x = jnp.transpose(x_nchw, (0, 2, 3, 1)).astype(jnp.bfloat16)
    xw = jnp.stack([x[:, 0::2, 0::2, :], x[:, 0::2, 1::2, :],
                    x[:, 1::2, 0::2, :], x[:, 1::2, 1::2, :]], axis=1)   # (N,4,Ho,Wo,Cin)
    xw = jnp.pad(xw, ((0, 0), (0, 0), (2, 2), (0, 0), (0, 0)))          # 2-row zero halo

    # ---- per-generation row-tile size: largest divisor of Ho whose working set fits ----
    try:
        vmem_cap = int(pltpu.get_tpu_info().vmem_capacity_bytes)
    except Exception:
        vmem_cap = 64 * 2**20                                   # v7x-safe fallback

    def tile_bytes(th):
        r1, m1, m2 = (th + 4) * Wo, (th + 2) * Wo, th * Wo
        return int(
            2 * (4 * r1 * Cin) * 2                      # xw block (double-buffered, bf16)
            + 2 * (m2 * Cout) * 4                       # out block (double-buffered, f32)
            + (9 * Cin * Cmid + 9 * Cmid * Cout) * 2    # packed conv weights (bf16)
            + (r1 * 3 * Cin + m1 * 3 * Cmid) * 2        # im2col scratch slabs (bf16)
            + (m1 * Cmid + m2 * Cout) * 4               # f32 conv accumulators
            + (r1 * Cin + 2 * m1 * Cmid) * 2)           # pooled / h1 / shift temporaries

    budget = max(4 * 2**20, int(0.40 * vmem_cap))
    TH = 1
    for cand in range(Ho, 0, -1):
        if Ho % cand == 0 and tile_bytes(cand) <= budget:
            TH = cand
            break
    n_tiles = Ho // TH

    # overlapped row tiles (2-pooled-row halo each side: two stacked 3x3 convs),
    # rows flattened row-major so the kernel never reshapes.
    xw_t = jnp.stack([xw[:, :, j * TH:j * TH + TH + 4] for j in range(n_tiles)], axis=1)
    xw_t = xw_t.reshape(N, n_tiles, 4, (TH + 4) * Wo, Cin)

    def prep_w(w_oihw):
        # OIHW -> (kh, 3*Cin, Cout); lane order [kw=1 | kw=0 | kw=2] matches the
        # [centre | left | right] im2col lane blocks; bf16 for the MXU.
        w_k = jnp.transpose(w_oihw, (2, 3, 1, 0))                        # (kh, kw, Cin, Cout)
        return jnp.concatenate([w_k[:, 1], w_k[:, 0], w_k[:, 2]],
                               axis=1).astype(jnp.bfloat16)              # (3, 3*Cin, Cout)

    w1_k, w2_k = prep_w(w1), prep_w(w2)

    def bn_fold(gamma, beta, mean, var):
        scale = gamma / jnp.sqrt(var + BN_EPS)
        bias = beta - mean * scale
        return (scale.reshape(1, -1).astype(jnp.float32),
                bias.reshape(1, -1).astype(jnp.float32))

    s1, b1 = bn_fold(params["g1"], params["be1"], params["m1"], params["v1"])
    s2, b2 = bn_fold(params["g2"], params["be2"], params["m2"], params["v2"])

    vmem_limit = int(min(vmem_cap - 12 * 2**20, max(24 * 2**20, 2 * tile_bytes(TH))))
    flops = 2 * N * Ho * Wo * 9 * (Cin * Cmid + Cmid * Cout) + 4 * N * Ho * Wo * (Cin + Cmid + Cout)
    bytes_accessed = int(xw_t.size * 2 + N * Ho * Wo * Cout * 4 + (w1_k.size + w2_k.size) * 2)

    out = pl.pallas_call(
        functools.partial(_down_kernel, wo=Wo),
        out_shape=jax.ShapeDtypeStruct((N, Ho * Wo, Cout), out_dtype),
        grid=(N, n_tiles),
        in_specs=[
            pl.BlockSpec((1, 1, 4, (TH + 4) * Wo, Cin), lambda b, j: (b, j, 0, 0, 0)),
            pl.BlockSpec((3, 3 * Cin, Cmid), lambda b, j: (0, 0, 0)),
            pl.BlockSpec((1, Cmid), lambda b, j: (0, 0)),
            pl.BlockSpec((1, Cmid), lambda b, j: (0, 0)),
            pl.BlockSpec((3, 3 * Cmid, Cout), lambda b, j: (0, 0, 0)),
            pl.BlockSpec((1, Cout), lambda b, j: (0, 0)),
            pl.BlockSpec((1, Cout), lambda b, j: (0, 0)),
        ],
        out_specs=pl.BlockSpec((1, TH * Wo, Cout), lambda b, j: (b, j, 0)),
        scratch_shapes=[
            pltpu.VMEM(((TH + 4) * Wo, 3 * Cin), jnp.bfloat16),   # conv1 im2col slab
            pltpu.VMEM(((TH + 2) * Wo, 3 * Cmid), jnp.bfloat16),  # conv2 im2col slab
        ],
        compiler_params=pltpu.CompilerParams(
            dimension_semantics=("parallel", "parallel"),
            vmem_limit_bytes=vmem_limit),
        cost_estimate=pl.CostEstimate(flops=flops, transcendentals=0,
                                      bytes_accessed=bytes_accessed),
    )(xw_t, w1_k, s1, b1, w2_k, s2, b2)

    out = out.reshape(N, Ho, Wo, Cout)
    return jnp.transpose(out, (0, 3, 1, 2)).astype(out_dtype)     # back to NCHW


def down_ref(x_nchw, params):
    """Pure-JAX f32 reference (lax conv / reduce_window) for validation."""
    x = jnp.transpose(x_nchw, (0, 2, 3, 1))
    p = jax.lax.reduce_window(x, -jnp.inf, jax.lax.max,
                              (1, 2, 2, 1), (1, 2, 2, 1), "VALID")

    def conv_bn_relu(y, w_oihw, gamma, beta, mean, var):
        w_hwio = jnp.transpose(w_oihw, (2, 3, 1, 0))
        y = jax.lax.conv_general_dilated(y, w_hwio, (1, 1), "SAME",
                                         dimension_numbers=("NHWC", "HWIO", "NHWC"))
        y = (y - mean) / jnp.sqrt(var + BN_EPS) * gamma + beta
        return jnp.maximum(y, 0.0)

    p = conv_bn_relu(p, params["w1"], params["g1"], params["be1"], params["m1"], params["v1"])
    p = conv_bn_relu(p, params["w2"], params["g2"], params["be2"], params["m2"], params["v2"])
    return jnp.transpose(p, (0, 3, 1, 2))


def init_params(key, cin, cout):
    cmid = cout  # DoubleConv default: mid_channels = out_channels
    ks = jax.random.split(key, 10)
    return {
        "w1": 0.15 * jax.random.normal(ks[0], (cmid, cin, 3, 3), jnp.float32),
        "w2": 0.15 * jax.random.normal(ks[1], (cout, cmid, 3, 3), jnp.float32),
        "g1": 1.0 + 0.1 * jax.random.normal(ks[2], (cmid,), jnp.float32),
        "be1": 0.1 * jax.random.normal(ks[3], (cmid,), jnp.float32),
        "m1": 0.1 * jax.random.normal(ks[4], (cmid,), jnp.float32),
        "v1": jax.random.uniform(ks[5], (cmid,), jnp.float32, 0.5, 1.5),
        "g2": 1.0 + 0.1 * jax.random.normal(ks[6], (cout,), jnp.float32),
        "be2": 0.1 * jax.random.normal(ks[7], (cout,), jnp.float32),
        "m2": 0.1 * jax.random.normal(ks[8], (cout,), jnp.float32),
        "v2": jax.random.uniform(ks[9], (cout,), jnp.float32, 0.5, 1.5),
    }


if __name__ == "__main__":
    key = jax.random.PRNGKey(0)
    kx, kp = jax.random.split(key)
    N, Cin, H, W = 2, 4, 16, 16
    Cout = 8

    x = jax.random.normal(kx, (N, Cin, H, W), jnp.float32)
    params = init_params(kp, Cin, Cout)

    out = jax.block_until_ready(down_forward(x, params))
    ref = jax.block_until_ready(down_ref(x, params))

    assert out.shape == (N, Cout, H // 2, W // 2), out.shape
    max_err = float(jnp.max(jnp.abs(out - ref)))
    # bf16 MXU operands vs f32 reference -> bf16-appropriate tolerance.
    assert jnp.allclose(out, ref, atol=5e-2, rtol=5e-2), f"max abs err {max_err}"
    print("KERNEL_OK")
</pallas_src>

<mosaic_0001>
module attributes {stable_mosaic.version = 11 : i64} {
  func.func @_down_kernel(%arg0: i32, %arg1: i32, %arg2: memref<1x1x4x96x4xbf16, #tpu.memory_space<vmem>>, %arg3: memref<3x12x8xbf16, #tpu.memory_space<vmem>>, %arg4: memref<1x8xf32, #tpu.memory_space<vmem>>, %arg5: memref<1x8xf32, #tpu.memory_space<vmem>>, %arg6: memref<3x24x8xbf16, #tpu.memory_space<vmem>>, %arg7: memref<1x8xf32, #tpu.memory_space<vmem>>, %arg8: memref<1x8xf32, #tpu.memory_space<vmem>>, %arg9: memref<1x64x8xf32, #tpu.memory_space<vmem>>, %arg10: memref<96x12xbf16, #tpu.memory_space<vmem>>, %arg11: memref<80x24xbf16, #tpu.memory_space<vmem>>) attributes {dimension_semantics = [#tpu.dimension_semantics<parallel>, #tpu.dimension_semantics<parallel>], iteration_bounds = array<i64: 2, 1>, scalar_prefetch = 0 : i64, scratch_operands = 2 : i64, tpu.core_type = #tpu.core_type<tc>, window_params = [{transform_indices = @transform_0, window_bounds = array<i64: 1, 1, 4, 96, 4>}, {pipeline_mode = #tpu.pipeline_mode<synchronous>, transform_indices = @transform_1, window_bounds = array<i64: 3, 12, 8>}, {pipeline_mode = #tpu.pipeline_mode<synchronous>, transform_indices = @transform_2, window_bounds = array<i64: 1, 8>}, {pipeline_mode = #tpu.pipeline_mode<synchronous>, transform_indices = @transform_3, window_bounds = array<i64: 1, 8>}, {pipeline_mode = #tpu.pipeline_mode<synchronous>, transform_indices = @transform_4, window_bounds = array<i64: 3, 24, 8>}, {pipeline_mode = #tpu.pipeline_mode<synchronous>, transform_indices = @transform_5, window_bounds = array<i64: 1, 8>}, {pipeline_mode = #tpu.pipeline_mode<synchronous>, transform_indices = @transform_6, window_bounds = array<i64: 1, 8>}, {transform_indices = @transform_7, window_bounds = array<i64: 1, 64, 8>}]} {
    %c0 = arith.constant 0 : index
    %c0_0 = arith.constant 0 : index
    %c0_1 = arith.constant 0 : index
    %c0_2 = arith.constant 0 : index
    %c0_3 = arith.constant 0 : index
    %0 = vector.load %arg2[%c0, %c0_0, %c0_1, %c0_2, %c0_3] : memref<1x1x4x96x4xbf16, #tpu.memory_space<vmem>>, vector<1x1x4x96x4xbf16>
    %1 = vector.shape_cast %0 : vector<1x1x4x96x4xbf16> to vector<4x96x4xbf16>
    %2 = vector.extract_strided_slice %1 {offsets = [0, 0, 0], sizes = [1, 96, 4], strides = [1, 1, 1]} : vector<4x96x4xbf16> to vector<1x96x4xbf16>
    %3 = vector.shape_cast %2 : vector<1x96x4xbf16> to vector<96x4xbf16>
    %4 = vector.extract_strided_slice %1 {offsets = [1, 0, 0], sizes = [1, 96, 4], strides = [1, 1, 1]} : vector<4x96x4xbf16> to vector<1x96x4xbf16>
    %5 = vector.shape_cast %4 : vector<1x96x4xbf16> to vector<96x4xbf16>
    %6 = arith.maximumf %3, %5 : vector<96x4xbf16>
    %7 = vector.extract_strided_slice %1 {offsets = [2, 0, 0], sizes = [1, 96, 4], strides = [1, 1, 1]} : vector<4x96x4xbf16> to vector<1x96x4xbf16>
    %8 = vector.shape_cast %7 : vector<1x96x4xbf16> to vector<96x4xbf16>
    %9 = vector.extract_strided_slice %1 {offsets = [3, 0, 0], sizes = [1, 96, 4], strides = [1, 1, 1]} : vector<4x96x4xbf16> to vector<1x96x4xbf16>
    %10 = vector.shape_cast %9 : vector<1x96x4xbf16> to vector<96x4xbf16>
    %11 = arith.maximumf %8, %10 : vector<96x4xbf16>
    %12 = arith.maximumf %6, %11 : vector<96x4xbf16>
    %13 = tpu.iota {dimensions = array<i32: 0>} : vector<96x1xi32>
    %c8_i32 = arith.constant 8 : i32
    %c0_i32 = arith.constant 0 : i32
    %14 = arith.cmpi eq, %c8_i32, %c0_i32 : i32
    %c1_i32 = arith.constant 1 : i32
    %15 = arith.select %14, %c1_i32, %c8_i32 : i32
    %16 = vector.broadcast %15 : i32 to vector<96x1xi32>
    %17 = arith.remsi %13, %16 : vector<96x1xi32>
    %c0_i32_4 = arith.constant 0 : i32
    %18 = vector.broadcast %c0_i32_4 : i32 to vector<96x1xi32>
    %19 = arith.cmpi ne, %17, %18 : vector<96x1xi32>
    %c0_i32_5 = arith.constant 0 : i32
    %20 = vector.broadcast %c0_i32_5 : i32 to vector<96x1xi32>
    %21 = arith.cmpi slt, %17, %20 : vector<96x1xi32>
    %c0_i32_6 = arith.constant 0 : i32
    %22 = arith.cmpi slt, %15, %c0_i32_6 : i32
    %23 = vector.broadcast %22 : i1 to vector<96x1xi1>
    %24 = vector.broadcast %23 : vector<96x1xi1> to vector<96x1xi1>
    %25 = arith.xori %21, %24 : vector<96x1xi1>
    %26 = arith.andi %25, %19 : vector<96x1xi1>
    %27 = vector.broadcast %15 : i32 to vector<96x1xi32>
    %28 = arith.addi %17, %27 : vector<96x1xi32>
    %29 = arith.select %26, %28, %17 : vector<96x1xi1>, vector<96x1xi32>
    %c0_7 = arith.constant 0 : index
    %c0_8 = arith.constant 0 : index
    %30 = vector.load %arg10[%c0_7, %c0_8] : memref<96x12xbf16, #tpu.memory_space<vmem>>, vector<96x4xbf16>
    tpu.vector_store %arg10[%c0_7, %c0_8], %12 {strides = array<i32>} : memref<96x12xbf16, #tpu.memory_space<vmem>>, vector<96x4xbf16>,
    %c7_i32 = arith.constant 7 : i32
    %31 = vector.broadcast %c7_i32 : i32 to vector<96x1xi32>
    %32 = arith.cmpi eq, %29, %31 : vector<96x1xi32>
    %c0_i32_9 = arith.constant 0 : i32
    %33 = arith.sitofp %c0_i32_9 : i32 to bf16
    %34 = vector.shape_cast %32 : vector<96x1xi1> to vector<96x1xi1>
    %35 = vector.broadcast %34 : vector<96x1xi1> to vector<96x4xi1>
    %36 = vector.broadcast %33 : bf16 to vector<96x4xbf16>
    %37 = arith.select %35, %36, %12 : vector<96x4xi1>, vector<96x4xbf16>
    %38 = vector.extract_strided_slice %37 {offsets = [0, 0], sizes = [95, 4], strides = [1, 1]} : vector<96x4xbf16> to vector<95x4xbf16>
    %c1 = arith.constant 1 : index
    %c4 = arith.constant 4 : index
    %39 = vector.load %arg10[%c1, %c4] : memref<96x12xbf16, #tpu.memory_space<vmem>>, vector<95x4xbf16>
    tpu.vector_store %arg10[%c1, %c4], %38 {strides = array<i32>} : memref<96x12xbf16, #tpu.memory_space<vmem>>, vector<95x4xbf16>,
    %cst = arith.constant 0.000000e+00 : bf16
    %40 = vector.broadcast %cst : bf16 to vector<1x4xbf16>
    %c0_10 = arith.constant 0 : index
    %c4_11 = arith.constant 4 : index
    %41 = vector.load %arg10[%c0_10, %c4_11] : memref<96x12xbf16, #tpu.memory_space<vmem>>, vector<1x4xbf16>
    tpu.vector_store %arg10[%c0_10, %c4_11], %40 {strides = array<i32>} : memref<96x12xbf16, #tpu.memory_space<vmem>>, vector<1x4xbf16>,
    %c0_i32_12 = arith.constant 0 : i32
    %42 = vector.broadcast %c0_i32_12 : i32 to vector<96x1xi32>
    %43 = arith.cmpi eq, %29, %42 : vector<96x1xi32>
    %c0_i32_13 = arith.constant 0 : i32
    %44 = arith.sitofp %c0_i32_13 : i32 to bf16
    %45 = vector.shape_cast %43 : vector<96x1xi1> to vector<96x1xi1>
    %46 = vector.broadcast %45 : vector<96x1xi1> to vector<96x4xi1>
    %47 = vector.broadcast %44 : bf16 to vector<96x4xbf16>
    %48 = arith.select %46, %47, %12 : vector<96x4xi1>, vector<96x4xbf16>
    %49 = vector.extract_strided_slice %48 {offsets = [1, 0], sizes = [95, 4], strides = [1, 1]} : vector<96x4xbf16> to vector<95x4xbf16>
    %c0_14 = arith.constant 0 : index
    %c8 = arith.constant 8 : index
    %50 = vector.load %arg10[%c0_14, %c8] : memref<96x12xbf16, #tpu.memory_space<vmem>>, vector<95x4xbf16>
    tpu.vector_store %arg10[%c0_14, %c8], %49 {strides = array<i32>} : memref<96x12xbf16, #tpu.memory_space<vmem>>, vector<95x4xbf16>,
    %cst_15 = arith.constant 0.000000e+00 : bf16
    %51 = vector.broadcast %cst_15 : bf16 to vector<1x4xbf16>
    %c95 = arith.constant 95 : index
    %c8_16 = arith.constant 8 : index
    %52 = vector.load %arg10[%c95, %c8_16] : memref<96x12xbf16, #tpu.memory_space<vmem>>, vector<1x4xbf16>
    tpu.vector_store %arg10[%c95, %c8_16], %51 {strides = array<i32>} : memref<96x12xbf16, #tpu.memory_space<vmem>>, vector<1x4xbf16>,
    %c0_17 = arith.constant 0 : index
    %c0_18 = arith.constant 0 : index
    %53 = vector.load %arg10[%c0_17, %c0_18] : memref<96x12xbf16, #tpu.memory_space<vmem>>, vector<80x12xbf16>
    %c0_19 = arith.constant 0 : index
    %c0_20 = arith.constant 0 : index
    %c0_21 = arith.constant 0 : index
    %54 = vector.load %arg3[%c0_19, %c0_20, %c0_21] : memref<3x12x8xbf16, #tpu.memory_space<vmem>>, vector<1x12x8xbf16>
    %55 = vector.shape_cast %54 : vector<1x12x8xbf16> to vector<12x8xbf16>
    %cst_22 = arith.constant dense<0.000000e+00> : vector<80x8xf32>
    %56 = tpu.matmul %53, %55, %cst_22 {dimension_numbers = #tpu.dot_dimension_numbers<[1], [0], [0], [1], [0, 0, 1, 1], [], []>} : vector<80x12xbf16>, vector<12x8xbf16>, vector<80x8xf32> -> vector<80x8xf32>
    %c8_23 = arith.constant 8 : index
    %c0_24 = arith.constant 0 : index
    %57 = vector.load %arg10[%c8_23, %c0_24] : memref<96x12xbf16, #tpu.memory_space<vmem>>, vector<80x12xbf16>
    %c1_25 = arith.constant 1 : index
    %c0_26 = arith.constant 0 : index
    %c0_27 = arith.constant 0 : index
    %58 = vector.load %arg3[%c1_25, %c0_26, %c0_27] : memref<3x12x8xbf16, #tpu.memory_space<vmem>>, vector<1x12x8xbf16>
    %59 = vector.shape_cast %58 : vector<1x12x8xbf16> to vector<12x8xbf16>
    %cst_28 = arith.constant dense<0.000000e+00> : vector<80x8xf32>
    %60 = tpu.matmul %57, %59, %cst_28 {dimension_numbers = #tpu.dot_dimension_numbers<[1], [0], [0], [1], [0, 0, 1, 1], [], []>} : vector<80x12xbf16>, vector<12x8xbf16>, vector<80x8xf32> -> vector<80x8xf32>
    %61 = arith.addf %56, %60 : vector<80x8xf32>
    %c16 = arith.constant 16 : index
    %c0_29 = arith.constant 0 : index
    %62 = vector.load %arg10[%c16, %c0_29] : memref<96x12xbf16, #tpu.memory_space<vmem>>, vector<80x12xbf16>
    %c2 = arith.constant 2 : index
    %c0_30 = arith.constant 0 : index
    %c0_31 = arith.constant 0 : index
    %63 = vector.load %arg3[%c2, %c0_30, %c0_31] : memref<3x12x8xbf16, #tpu.memory_space<vmem>>, vector<1x12x8xbf16>
    %64 = vector.shape_cast %63 : vector<1x12x8xbf16> to vector<12x8xbf16>
    %cst_32 = arith.constant dense<0.000000e+00> : vector<80x8xf32>
    %65 = tpu.matmul %62, %64, %cst_32 {dimension_numbers = #tpu.dot_dimension_numbers<[1], [0], [0], [1], [0, 0, 1, 1], [], []>} : vector<80x12xbf16>, vector<12x8xbf16>, vector<80x8xf32> -> vector<80x8xf32>
    %66 = arith.addf %61, %65 : vector<80x8xf32>
    %c0_33 = arith.constant 0 : index
    %c0_34 = arith.constant 0 : index
    %67 = vector.load %arg4[%c0_33, %c0_34] : memref<1x8xf32, #tpu.memory_space<vmem>>, vector<1x8xf32>
    %68 = vector.broadcast %67 : vector<1x8xf32> to vector<80x8xf32>
    %69 = arith.mulf %66, %68 : vector<80x8xf32>
    %c0_35 = arith.constant 0 : index
    %c0_36 = arith.constant 0 : index
    %70 = vector.load %arg5[%c0_35, %c0_36] : memref<1x8xf32, #tpu.memory_space<vmem>>, vector<1x8xf32>
    %71 = vector.broadcast %70 : vector<1x8xf32> to vector<80x8xf32>
    %72 = arith.addf %69, %71 : vector<80x8xf32>
    %cst_37 = arith.constant 0.000000e+00 : f32
    %73 = vector.broadcast %cst_37 : f32 to vector<80x8xf32>
    %74 = arith.maximumf %72, %73 : vector<80x8xf32>
    %75 = arith.truncf %74 : vector<80x8xf32> to vector<80x8xbf16>
    %76 = tpu.iota {dimensions = array<i32: 0>} : vector<80x1xi32>
    %c8_i32_38 = arith.constant 8 : i32
    %c0_i32_39 = arith.constant 0 : i32
    %77 = arith.cmpi eq, %c8_i32_38, %c0_i32_39 : i32
    %c1_i32_40 = arith.constant 1 : i32
    %78 = arith.select %77, %c1_i32_40, %c8_i32_38 : i32
    %79 = vector.broadcast %78 : i32 to vector<80x1xi32>
    %80 = arith.remsi %76, %79 : vector<80x1xi32>
    %c0_i32_41 = arith.constant 0 : i32
    %81 = vector.broadcast %c0_i32_41 : i32 to vector<80x1xi32>
    %82 = arith.cmpi ne, %80, %81 : vector<80x1xi32>
    %c0_i32_42 = arith.constant 0 : i32
    %83 = vector.broadcast %c0_i32_42 : i32 to vector<80x1xi32>
    %84 = arith.cmpi slt, %80, %83 : vector<80x1xi32>
    %c0_i32_43 = arith.constant 0 : i32
    %85 = arith.cmpi slt, %78, %c0_i32_43 : i32
    %86 = vector.broadcast %85 : i1 to vector<80x1xi1>
    %87 = vector.broadcast %86 : vector<80x1xi1> to vector<80x1xi1>
    %88 = arith.xori %84, %87 : vector<80x1xi1>
    %89 = arith.andi %88, %82 : vector<80x1xi1>
    %90 = vector.broadcast %78 : i32 to vector<80x1xi32>
    %91 = arith.addi %80, %90 : vector<80x1xi32>
    %92 = arith.select %89, %91, %80 : vector<80x1xi1>, vector<80x1xi32>
    %c0_44 = arith.constant 0 : index
    %c0_45 = arith.constant 0 : index
    %93 = vector.load %arg11[%c0_44, %c0_45] : memref<80x24xbf16, #tpu.memory_space<vmem>>, vector<80x8xbf16>
    tpu.vector_store %arg11[%c0_44, %c0_45], %75 {strides = array<i32>} : memref<80x24xbf16, #tpu.memory_space<vmem>>, vector<80x8xbf16>,
    %c7_i32_46 = arith.constant 7 : i32
    %94 = vector.broadcast %c7_i32_46 : i32 to vector<80x1xi32>
    %95 = arith.cmpi eq, %92, %94 : vector<80x1xi32>
    %c0_i32_47 = arith.constant 0 : i32
    %96 = arith.sitofp %c0_i32_47 : i32 to bf16
    %97 = vector.shape_cast %95 : vector<80x1xi1> to vector<80x1xi1>
    %98 = vector.broadcast %97 : vector<80x1xi1> to vector<80x8xi1>
    %99 = vector.broadcast %96 : bf16 to vector<80x8xbf16>
    %100 = arith.select %98, %99, %75 : vector<80x8xi1>, vector<80x8xbf16>
    %101 = vector.extract_strided_slice %100 {offsets = [0, 0], sizes = [79, 8], strides = [1, 1]} : vector<80x8xbf16> to vector<79x8xbf16>
    %c1_48 = arith.constant 1 : index
    %c8_49 = arith.constant 8 : index
    %102 = vector.load %arg11[%c1_48, %c8_49] : memref<80x24xbf16, #tpu.memory_space<vmem>>, vector<79x8xbf16>
    tpu.vector_store %arg11[%c1_48, %c8_49], %101 {strides = array<i32>} : memref<80x24xbf16, #tpu.memory_space<vmem>>, vector<79x8xbf16>,
    %cst_50 = arith.constant 0.000000e+00 : bf16
    %103 = vector.broadcast %cst_50 : bf16 to vector<1x8xbf16>
    %c0_51 = arith.constant 0 : index
    %c8_52 = arith.constant 8 : index
    %104 = vector.load %arg11[%c0_51, %c8_52] : memref<80x24xbf16, #tpu.memory_space<vmem>>, vector<1x8xbf16>
    tpu.vector_store %arg11[%c0_51, %c8_52], %103 {strides = array<i32>} : memref<80x24xbf16, #tpu.memory_space<vmem>>, vector<1x8xbf16>,
    %c0_i32_53 = arith.constant 0 : i32
    %105 = vector.broadcast %c0_i32_53 : i32 to vector<80x1xi32>
    %106 = arith.cmpi eq, %92, %105 : vector<80x1xi32>
    %c0_i32_54 = arith.constant 0 : i32
    %107 = arith.sitofp %c0_i32_54 : i32 to bf16
    %108 = vector.shape_cast %106 : vector<80x1xi1> to vector<80x1xi1>
    %109 = vector.broadcast %108 : vector<80x1xi1> to vector<80x8xi1>
    %110 = vector.broadcast %107 : bf16 to vector<80x8xbf16>
    %111 = arith.select %109, %110, %75 : vector<80x8xi1>, vector<80x8xbf16>
    %112 = vector.extract_strided_slice %111 {offsets = [1, 0], sizes = [79, 8], strides = [1, 1]} : vector<80x8xbf16> to vector<79x8xbf16>
    %c0_55 = arith.constant 0 : index
    %c16_56 = arith.constant 16 : index
    %113 = vector.load %arg11[%c0_55, %c16_56] : memref<80x24xbf16, #tpu.memory_space<vmem>>, vector<79x8xbf16>
    tpu.vector_store %arg11[%c0_55, %c16_56], %112 {strides = array<i32>} : memref<80x24xbf16, #tpu.memory_space<vmem>>, vector<79x8xbf16>,
    %cst_57 = arith.constant 0.000000e+00 : bf16
    %114 = vector.broadcast %cst_57 : bf16 to vector<1x8xbf16>
    %c79 = arith.constant 79 : index
    %c16_58 = arith.constant 16 : index
    %115 = vector.load %arg11[%c79, %c16_58] : memref<80x24xbf16, #tpu.memory_space<vmem>>, vector<1x8xbf16>
    tpu.vector_store %arg11[%c79, %c16_58], %114 {strides = array<i32>} : memref<80x24xbf16, #tpu.memory_space<vmem>>, vector<1x8xbf16>,
    %c0_i32_59 = arith.constant 0 : i32
    %116 = arith.cmpi eq, %arg1, %c0_i32_59 : i32
    %117 = arith.extui %116 : i1 to i32
    %c0_i32_60 = arith.constant 0 : i32
    %118 = arith.cmpi ne, %117, %c0_i32_60 : i32
    scf.if %118 {
      %cst_89 = arith.constant 0.000000e+00 : bf16
      %147 = vector.broadcast %cst_89 : bf16 to vector<8x24xbf16>
      %c0_90 = arith.constant 0 : index
      %c0_91 = arith.constant 0 : index
      %148 = vector.load %arg11[%c0_90, %c0_91] : memref<80x24xbf16, #tpu.memory_space<vmem>>, vector<8x24xbf16>
      tpu.vector_store %arg11[%c0_90, %c0_91], %147 {strides = array<i32>} : memref<80x24xbf16, #tpu.memory_space<vmem>>, vector<8x24xbf16>,
    } else {
    }
    %c0_i32_61 = arith.constant 0 : i32
    %119 = arith.cmpi eq, %arg1, %c0_i32_61 : i32
    %120 = arith.extui %119 : i1 to i32
    %c0_i32_62 = arith.constant 0 : i32
    %121 = arith.cmpi ne, %120, %c0_i32_62 : i32
    scf.if %121 {
      %cst_89 = arith.constant 0.000000e+00 : bf16
      %147 = vector.broadcast %cst_89 : bf16 to vector<8x24xbf16>
      %c72 = arith.constant 72 : index
      %c0_90 = arith.constant 0 : index
      %148 = vector.load %arg11[%c72, %c0_90] : memref<80x24xbf16, #tpu.memory_space<vmem>>, vector<8x24xbf16>
      tpu.vector_store %arg11[%c72, %c0_90], %147 {strides = array<i32>} : memref<80x24xbf16, #tpu.memory_space<vmem>>, vector<8x24xbf16>,
    } else {
    }
    %c0_63 = arith.constant 0 : index
    %c0_64 = arith.constant 0 : index
    %122 = vector.load %arg11[%c0_63, %c0_64] : memref<80x24xbf16, #tpu.memory_space<vmem>>, vector<64x24xbf16>
    %c0_65 = arith.constant 0 : index
    %c0_66 = arith.constant 0 : index
    %c0_67 = arith.constant 0 : index
    %123 = vector.load %arg6[%c0_65, %c0_66, %c0_67] : memref<3x24x8xbf16, #tpu.memory_space<vmem>>, vector<1x24x8xbf16>
    %124 = vector.shape_cast %123 : vector<1x24x8xbf16> to vector<24x8xbf16>
    %cst_68 = arith.constant dense<0.000000e+00> : vector<64x8xf32>
    %125 = tpu.matmul %122, %124, %cst_68 {dimension_numbers = #tpu.dot_dimension_numbers<[1], [0], [0], [1], [0, 0, 1, 1], [], []>} : vector<64x24xbf16>, vector<24x8xbf16>, vector<64x8xf32> -> vector<64x8xf32>
    %c8_69 = arith.constant 8 : index
    %c0_70 = arith.constant 0 : index
    %126 = vector.load %arg11[%c8_69, %c0_70] : memref<80x24xbf16, #tpu.memory_space<vmem>>, vector<64x24xbf16>
    %c1_71 = arith.constant 1 : index
    %c0_72 = arith.constant 0 : index
    %c0_73 = arith.constant 0 : index
    %127 = vector.load %arg6[%c1_71, %c0_72, %c0_73] : memref<3x24x8xbf16, #tpu.memory_space<vmem>>, vector<1x24x8xbf16>
    %128 = vector.shape_cast %127 : vector<1x24x8xbf16> to vector<24x8xbf16>
    %cst_74 = arith.constant dense<0.000000e+00> : vector<64x8xf32>
    %129 = tpu.matmul %126, %128, %cst_74 {dimension_numbers = #tpu.dot_dimension_numbers<[1], [0], [0], [1], [0, 0, 1, 1], [], []>} : vector<64x24xbf16>, vector<24x8xbf16>, vector<64x8xf32> -> vector<64x8xf32>
    %130 = arith.addf %125, %129 : vector<64x8xf32>
    %c16_75 = arith.constant 16 : index
    %c0_76 = arith.constant 0 : index
    %131 = vector.load %arg11[%c16_75, %c0_76] : memref<80x24xbf16, #tpu.memory_space<vmem>>, vector<64x24xbf16>
    %c2_77 = arith.constant 2 : index
    %c0_78 = arith.constant 0 : index
    %c0_79 = arith.constant 0 : index
    %132 = vector.load %arg6[%c2_77, %c0_78, %c0_79] : memref<3x24x8xbf16, #tpu.memory_space<vmem>>, vector<1x24x8xbf16>
    %133 = vector.shape_cast %132 : vector<1x24x8xbf16> to vector<24x8xbf16>
    %cst_80 = arith.constant dense<0.000000e+00> : vector<64x8xf32>
    %134 = tpu.matmul %131, %133, %cst_80 {dimension_numbers = #tpu.dot_dimension_numbers<[1], [0], [0], [1], [0, 0, 1, 1], [], []>} : vector<64x24xbf16>, vector<24x8xbf16>, vector<64x8xf32> -> vector<64x8xf32>
    %135 = arith.addf %130, %134 : vector<64x8xf32>
    %c0_81 = arith.constant 0 : index
    %c0_82 = arith.constant 0 : index
    %136 = vector.load %arg7[%c0_81, %c0_82] : memref<1x8xf32, #tpu.memory_space<vmem>>, vector<1x8xf32>
    %137 = vector.broadcast %136 : vector<1x8xf32> to vector<64x8xf32>
    %138 = arith.mulf %135, %137 : vector<64x8xf32>
    %c0_83 = arith.constant 0 : index
    %c0_84 = arith.constant 0 : index
    %139 = vector.load %arg8[%c0_83, %c0_84] : memref<1x8xf32, #tpu.memory_space<vmem>>, vector<1x8xf32>
    %140 = vector.broadcast %139 : vector<1x8xf32> to vector<64x8xf32>
    %141 = arith.addf %138, %140 : vector<64x8xf32>
    %cst_85 = arith.constant 0.000000e+00 : f32
    %142 = vector.broadcast %cst_85 : f32 to vector<64x8xf32>
    %143 = arith.maximumf %141, %142 : vector<64x8xf32>
    %c0_86 = arith.constant 0 : index
    %c0_87 = arith.constant 0 : index
    %c0_88 = arith.constant 0 : index
    %144 = vector.load %arg9[%c0_86, %c0_87, %c0_88] : memref<1x64x8xf32, #tpu.memory_space<vmem>>, vector<1x64x8xf32>
    %145 = vector.shape_cast %144 : vector<1x64x8xf32> to vector<64x8xf32>
    %146 = vector.shape_cast %143 : vector<64x8xf32> to vector<1x64x8xf32>
    tpu.vector_store %arg9[%c0_86, %c0_87, %c0_88], %146 {strides = array<i32>} : memref<1x64x8xf32, #tpu.memory_space<vmem>>, vector<1x64x8xf32>,
    return
  }
  func.func @transform_0(%arg0: i32, %arg1: i32) -> (i32, i32, i32, i32, i32) {
    %c0_i32 = arith.constant 0 : i32
    %c0_i32_0 = arith.constant 0 : i32
    %c0_i32_1 = arith.constant 0 : i32
    %c0_i32_2 = arith.constant 0 : i32
    return %arg0, %arg1, %c0_i32, %c0_i32_0, %c0_i32_1 : i32, i32, i32, i32, i32
  }
  func.func @transform_1(%arg0: i32, %arg1: i32) -> (i32, i32, i32) {
    %c0_i32 = arith.constant 0 : i32
    %c0_i32_0 = arith.constant 0 : i32
    %c0_i32_1 = arith.constant 0 : i32
    %c0_i32_2 = arith.constant 0 : i32
    return %c0_i32, %c0_i32_0, %c0_i32_1 : i32, i32, i32
  }
  func.func @transform_2(%arg0: i32, %arg1: i32) -> (i32, i32) {
    %c0_i32 = arith.constant 0 : i32
    %c0_i32_0 = arith.constant 0 : i32
    %c0_i32_1 = arith.constant 0 : i32
    return %c0_i32, %c0_i32_0 : i32, i32
  }
  func.func @transform_3(%arg0: i32, %arg1: i32) -> (i32, i32) {
    %c0_i32 = arith.constant 0 : i32
    %c0_i32_0 = arith.constant 0 : i32
    %c0_i32_1 = arith.constant 0 : i32
    return %c0_i32, %c0_i32_0 : i32, i32
  }
  func.func @transform_4(%arg0: i32, %arg1: i32) -> (i32, i32, i32) {
    %c0_i32 = arith.constant 0 : i32
    %c0_i32_0 = arith.constant 0 : i32
    %c0_i32_1 = arith.constant 0 : i32
    %c0_i32_2 = arith.constant 0 : i32
    return %c0_i32, %c0_i32_0, %c0_i32_1 : i32, i32, i32
  }
  func.func @transform_5(%arg0: i32, %arg1: i32) -> (i32, i32) {
    %c0_i32 = arith.constant 0 : i32
    %c0_i32_0 = arith.constant 0 : i32
    %c0_i32_1 = arith.constant 0 : i32
    return %c0_i32, %c0_i32_0 : i32, i32
  }
  func.func @transform_6(%arg0: i32, %arg1: i32) -> (i32, i32) {
    %c0_i32 = arith.constant 0 : i32
    %c0_i32_0 = arith.constant 0 : i32
    %c0_i32_1 = arith.constant 0 : i32
    return %c0_i32, %c0_i32_0 : i32, i32
  }
  func.func @transform_7(%arg0: i32, %arg1: i32) -> (i32, i32, i32) {
    %c0_i32 = arith.constant 0 : i32
    %c0_i32_0 = arith.constant 0 : i32
    return %arg0, %arg1, %c0_i32 : i32, i32, i32
  }
}

</mosaic_0001>

<llo_original>
// kernel: tpu_custom_call.1
$region0: #{tpu_custom_call.1}
  #allocation0 [shape = 'u32[]', space=smem, size = 0x4, offset = 0x4, fixed_abs, tag = 'smem constant byte address 0x4 - core index']
  #allocation1 [shape = 'u32[144,128]{1,0:T(1,128)}', space=vmem, size = 0x12000, scoped, tag = 'internal scratch']
  #allocation2 [shape = 'bf16[96,12]{1,0:T(16,128)(2,1)}', space=vmem, size = 0x6000, scoped, tag = 'scratch operand']
  #allocation3 [shape = 'bf16[80,24]{1,0:T(16,128)(2,1)}', space=vmem, size = 0x5000, scoped, tag = 'scratch operand']
  %s0 = inlined_call_operand.vmem [shape: bf16[2,1,4,96,4], index: 0, kind: input, shape index: {}]
  %s1 = inlined_call_operand.vmem [shape: bf16[3,12,8], index: 1, kind: input, shape index: {}]
  %s2 = inlined_call_operand.vmem [shape: f32[1,8], index: 2, kind: input, shape index: {}]
  %s3 = inlined_call_operand.vmem [shape: f32[1,8], index: 3, kind: input, shape index: {}]
  %s4 = inlined_call_operand.vmem [shape: bf16[3,24,8], index: 4, kind: input, shape index: {}]
  %s5 = inlined_call_operand.vmem [shape: f32[1,8], index: 5, kind: input, shape index: {}]
  %s6 = inlined_call_operand.vmem [shape: f32[1,8], index: 6, kind: input, shape index: {}]
  %s7 = inlined_call_operand.vmem [shape: f32[2,64,8], index: 7, kind: output, shape index: {}]
  %s8 = sld [smem:[#allocation0]]
  $region65: #{tpu_custom_call.1} parent=0
    _
  %s10 = ssub.s32 1, %s8
  %s11 = scalar_select 0, %s10, %s8
  loop: start=0, step=1, limit=4
  $region2: #{tpu_custom_call.1} parent=0 // loop_pre_header
    _
  $region3: #{tpu_custom_call.1} parent=0 // loop_header
    %s13 = sphi 0, %s17
    %p14 = scmp.ge.s32.totalorder %s13, 4
    %s20 = sphi 0, %s32
    %s21 = sphi 0, %s28
    %s22 = sphi 0, %s20
    %s23 = sphi 0, %s21
    %s24 = sphi 0, %s22
    %s25 = sphi 0, %s23
    %s37 = sphi 0, %s39
    %s40 = sphi 0, %s37
    %s41 = sphi 0, %s40
    %s57 = sphi 0, %s41
    %s61 = sphi 0, %s61
    %s63 = sphi 0, %s61
    %s64 = sphi 0, %s63
    %s78 = sphi 0, %s64
    %s82 = sphi 0, %s82
    %s84 = sphi 0, %s82
    %s85 = sphi 0, %s84
    %s99 = sphi 0, %s85
    %s103 = sphi 0, %s103
    %s105 = sphi 0, %s103
    %s106 = sphi 0, %s105
    %s120 = sphi 0, %s106
    %s124 = sphi 0, %s124
    %s126 = sphi 0, %s124
    %s127 = sphi 0, %s126
    %s141 = sphi 0, %s127
    %s145 = sphi 0, %s145
    %s147 = sphi 0, %s145
    %s148 = sphi 0, %s147
    %s162 = sphi 0, %s148
    %s166 = sphi 0, %s166
    %s168 = sphi 0, %s166
    %s169 = sphi 0, %s168
    %s183 = sphi 0, %s169
    %s191 = sphi 0, %s193
    %s194 = sphi 0, %s191
    %s195 = sphi 0, %s194
    %s211 = sphi 0, %s195
  $region4: #{tpu_custom_call.1} parent=0 // loop_header_branch
    %16 = sbr.rel (%p14) target = $region8
  $region5: #{tpu_custom_call.1} parent=0 // loop_body
    %s18 = ssub.s32 %s13, 1
    %s19 = ssub.s32 %s13, 2
    %s26 = sadd.s32 1, %s21
    %p27 = scmp.ge.s32.totalorder %s26, 1
    %s28 = scalar_select %p27, 0, %s26
    %s29 = sadd.s32 1, %s20
    %s30 = scalar_select %p27, %s29, %s20
    %p31 = scmp.ge.s32.totalorder %s30, 2
    %s32 = scalar_select %p31, 0, %s30
    %s33 = ssub.s32 %s20, %s32
    %s34 = ssub.s32 %s21, %s28
    %s35 = sor.u32 %s33, %s34
    %p36 = scmp.eq.s32.totalorder %s35, 0
    %s38 = sadd.s32 %s37, 1
    %s39 = scalar_select %p36, %s37, %s38
    %p42 = pneg %p36
    %p43 = scmp.eq.s32.totalorder %s13, 1
    %p44 = por %p42, %p43
    %p45 = scmp.ne.s32.totalorder %s37, %s40
    %p46 = scmp.eq.s32.totalorder %s13, 0
    %p47 = por %p45, %p46
    %p48 = scmp.ne.s32.totalorder %s37, %s40
    %p49 = scmp.eq.s32.totalorder %s18, 1
    %p50 = por %p48, %p49
    %p51 = scmp.ne.s32.totalorder %s40, %s41
    %p52 = scmp.eq.s32.totalorder %s18, 0
    %p53 = por %p51, %p52
    %p54 = scmp.ne.s32.totalorder %s40, %s41
    %p55 = scmp.eq.s32.totalorder %s19, 1
    %p56 = por %p54, %p55
    %p58 = scmp.ne.s32.totalorder %s41, %s57
    %p59 = scmp.eq.s32.totalorder %s19, 0
    %p60 = por %p58, %p59
    %s62 = sadd.s32 %s61, 1
    %p65 = scmp.eq.s32.totalorder %s13, 1
    %p66 = scmp.ne.s32.totalorder %s61, %s63
    %p67 = scmp.eq.s32.totalorder %s13, 0
    %p68 = por %p66, %p67
    %p69 = scmp.ne.s32.totalorder %s61, %s63
    %p70 = scmp.eq.s32.totalorder %s18, 1
    %p71 = por %p69, %p70
    %p72 = scmp.ne.s32.totalorder %s63, %s64
    %p73 = scmp.eq.s32.totalorder %s18, 0
    %p74 = por %p72, %p73
    %p75 = scmp.ne.s32.totalorder %s63, %s64
    %p76 = scmp.eq.s32.totalorder %s19, 1
    %p77 = por %p75, %p76
    %p79 = scmp.ne.s32.totalorder %s64, %s78
    %p80 = scmp.eq.s32.totalorder %s19, 0
    %p81 = por %p79, %p80
    %s83 = sadd.s32 %s82, 1
    %p86 = scmp.eq.s32.totalorder %s13, 1
    %p87 = scmp.ne.s32.totalorder %s82, %s84
    %p88 = scmp.eq.s32.totalorder %s13, 0
    %p89 = por %p87, %p88
    %p90 = scmp.ne.s32.totalorder %s82, %s84
    %p91 = scmp.eq.s32.totalorder %s18, 1
    %p92 = por %p90, %p91
    %p93 = scmp.ne.s32.totalorder %s84, %s85
    %p94 = scmp.eq.s32.totalorder %s18, 0
    %p95 = por %p93, %p94
    %p96 = scmp.ne.s32.totalorder %s84, %s85
    %p97 = scmp.eq.s32.totalorder %s19, 1
    %p98 = por %p96, %p97
    %p100 = scmp.ne.s32.totalorder %s85, %s99
    %p101 = scmp.eq.s32.totalorder %s19, 0
    %p102 = por %p100, %p101
    %s104 = sadd.s32 %s103, 1
    %p107 = scmp.eq.s32.totalorder %s13, 1
    %p108 = scmp.ne.s32.totalorder %s103, %s105
    %p109 = scmp.eq.s32.totalorder %s13, 0
    %p110 = por %p108, %p109
    %p111 = scmp.ne.s32.totalorder %s103, %s105
    %p112 = scmp.eq.s32.totalorder %s18, 1
    %p113 = por %p111, %p112
    %p114 = scmp.ne.s32.totalorder %s105, %s106
    %p115 = scmp.eq.s32.totalorder %s18, 0
    %p116 = por %p114, %p115
    %p117 = scmp.ne.s32.totalorder %s105, %s106
    %p118 = scmp.eq.s32.totalorder %s19, 1
    %p119 = por %p117, %p118
    %p121 = scmp.ne.s32.totalorder %s106, %s120
    %p122 = scmp.eq.s32.totalorder %s19, 0
    %p123 = por %p121, %p122
    %s125 = sadd.s32 %s124, 1
    %p128 = scmp.eq.s32.totalorder %s13, 1
    %p129 = scmp.ne.s32.totalorder %s124, %s126
    %p130 = scmp.eq.s32.totalorder %s13, 0
    %p131 = por %p129, %p130
    %p132 = scmp.ne.s32.totalorder %s124, %s126
    %p133 = scmp.eq.s32.totalorder %s18, 1
    %p134 = por %p132, %p133
    %p135 = scmp.ne.s32.totalorder %s126, %s127
    %p136 = scmp.eq.s32.totalorder %s18, 0
    %p137 = por %p135, %p136
    %p138 = scmp.ne.s32.totalorder %s126, %s127
    %p139 = scmp.eq.s32.totalorder %s19, 1
    %p140 = por %p138, %p139
    %p142 = scmp.ne.s32.totalorder %s127, %s141
    %p143 = scmp.eq.s32.totalorder %s19, 0
    %p144 = por %p142, %p143
    %s146 = sadd.s32 %s145, 1
    %p149 = scmp.eq.s32.totalorder %s13, 1
    %p150 = scmp.ne.s32.totalorder %s145, %s147
    %p151 = scmp.eq.s32.totalorder %s13, 0
    %p152 = por %p150, %p151
    %p153 = scmp.ne.s32.totalorder %s145, %s147
    %p154 = scmp.eq.s32.totalorder %s18, 1
    %p155 = por %p153, %p154
    %p156 = scmp.ne.s32.totalorder %s147, %s148
    %p157 = scmp.eq.s32.totalorder %s18, 0
    %p158 = por %p156, %p157
    %p159 = scmp.ne.s32.totalorder %s147, %s148
    %p160 = scmp.eq.s32.totalorder %s19, 1
    %p161 = por %p159, %p160
    %p163 = scmp.ne.s32.totalorder %s148, %s162
    %p164 = scmp.eq.s32.totalorder %s19, 0
    %p165 = por %p163, %p164
    %s167 = sadd.s32 %s166, 1
    %p170 = scmp.eq.s32.totalorder %s13, 1
    %p171 = scmp.ne.s32.totalorder %s166, %s168
    %p172 = scmp.eq.s32.totalorder %s13, 0
    %p173 = por %p171, %p172
    %p174 = scmp.ne.s32.totalorder %s166, %s168
    %p175 = scmp.eq.s32.totalorder %s18, 1
    %p176 = por %p174, %p175
    %p177 = scmp.ne.s32.totalorder %s168, %s169
    %p178 = scmp.eq.s32.totalorder %s18, 0
    %p179 = por %p177, %p178
    %p180 = scmp.ne.s32.totalorder %s168, %s169
    %p181 = scmp.eq.s32.totalorder %s19, 1
    %p182 = por %p180, %p181
    %p184 = scmp.ne.s32.totalorder %s169, %s183
    %p185 = scmp.eq.s32.totalorder %s19, 0
    %p186 = por %p184, %p185
    %s187 = ssub.s32 %s20, %s32
    %s188 = ssub.s32 %s21, %s28
    %s189 = sor.u32 %s187, %s188
    %p190 = scmp.eq.s32.totalorder %s189, 0
    %s192 = sadd.s32 %s191, 1
    %s193 = scalar_select %p190, %s191, %s192
    %p196 = pneg %p190
    %p197 = scmp.eq.s32.totalorder %s13, 1
    %p198 = por %p196, %p197
    %p199 = scmp.ne.s32.totalorder %s191, %s194
    %p200 = scmp.eq.s32.totalorder %s13, 0
    %p201 = por %p199, %p200
    %p202 = scmp.ne.s32.totalorder %s191, %s194
    %p203 = scmp.eq.s32.totalorder %s18, 1
    %p204 = por %p202, %p203
    %p205 = scmp.ne.s32.totalorder %s194, %s195
    %p206 = scmp.eq.s32.totalorder %s18, 0
    %p207 = por %p205, %p206
    %p208 = scmp.ne.s32.totalorder %s194, %s195
    %p209 = scmp.eq.s32.totalorder %s19, 1
    %p210 = por %p208, %p209
    %p212 = scmp.ne.s32.totalorder %s195, %s211
    %p213 = scmp.eq.s32.totalorder %s19, 0
    %p214 = por %p212, %p213
    %p215 = scmp.le.s32.totalorder 1, %s13
    %p216 = scmp.lt.s32.totalorder %s13, 3
    %p217 = pnand %p215, %p216
    %p218 = pneg %p217
    // Predicated region
    $region9: #{tpu_custom_call.1} parent=5 // pred_check
      _
    $region10: #{tpu_custom_call.1} parent=5 // pred_check_branch
      %220 = sbr.rel (%p217) target = $region12
    $region11: #{tpu_custom_call.1} parent=5 // pred_region
      %s221 = ssub.s32 %s13, 1
      // Predicated region
      $region13: #{tpu_custom_call.1} parent=11 // pred_check
        %p222 = pneg %p74
      $region14: #{tpu_custom_call.1} parent=11 // pred_check_branch
        %224 = sbr.rel (%p222) target = $region16
      $region15: #{tpu_custom_call.1} parent=11 // pred_region
        _
      $region16: #{tpu_custom_call.1} parent=11 // pred_fallthru
        _
      // Predicated region
      $region17: #{tpu_custom_call.1} parent=11 // pred_check
        %p225 = pneg %p95
      $region18: #{tpu_custom_call.1} parent=11 // pred_check_branch
        %227 = sbr.rel (%p225) target = $region20
      $region19: #{tpu_custom_call.1} parent=11 // pred_region
        _
      $region20: #{tpu_custom_call.1} parent=11 // pred_fallthru
        _
      // Predicated region
      $region21: #{tpu_custom_call.1} parent=11 // pred_check
        %p228 = pneg %p116
      $region22: #{tpu_custom_call.1} parent=11 // pred_check_branch
        %230 = sbr.rel (%p228) target = $region24
      $region23: #{tpu_custom_call.1} parent=11 // pred_region
        _
      $region24: #{tpu_custom_call.1} parent=11 // pred_fallthru
        _
      // Predicated region
      $region25: #{tpu_custom_call.1} parent=11 // pred_check
        %p231 = pneg %p137
      $region26: #{tpu_custom_call.1} parent=11 // pred_check_branch
        %233 = sbr.rel (%p231) target = $region28
      $region27: #{tpu_custom_call.1} parent=11 // pred_region
        _
      $region28: #{tpu_custom_call.1} parent=11 // pred_fallthru
        _
      // Predicated region
      $region29: #{tpu_custom_call.1} parent=11 // pred_check
        %p234 = pneg %p158
      $region30: #{tpu_custom_call.1} parent=11 // pred_check_branch
        %236 = sbr.rel (%p234) target = $region32
      $region31: #{tpu_custom_call.1} parent=11 // pred_region
        _
      $region32: #{tpu_custom_call.1} parent=11 // pred_fallthru
        _
      // Predicated region
      $region33: #{tpu_custom_call.1} parent=11 // pred_check
        %p237 = pneg %p179
      $region34: #{tpu_custom_call.1} parent=11 // pred_check_branch
        %239 = sbr.rel (%p237) target = $region36
      $region35: #{tpu_custom_call.1} parent=11 // pred_region
        _
      $region36: #{tpu_custom_call.1} parent=11 // pred_fallthru
        _
    $region12: #{tpu_custom_call.1} parent=5 // pred_fallthru
      _
    %p240 = scmp.lt.s32.totalorder %s13, 2
    // Predicated region
    $region37: #{tpu_custom_call.1} parent=5 // pred_check
      %p241 = pneg %p240
    $region38: #{tpu_custom_call.1} parent=5 // pred_check_branch
      %243 = sbr.rel (%p241) target = $region40
    $region39: #{tpu_custom_call.1} parent=5 // pred_region
      // Predicated region
      $region41: #{tpu_custom_call.1} parent=39 // pred_check
        %p244 = pneg %p47
      $region42: #{tpu_custom_call.1} parent=39 // pred_check_branch
        %246 = sbr.rel (%p244) target = $region44
      $region43: #{tpu_custom_call.1} parent=39 // pred_region
        %p247 = scmp.lt.s32.totalorder %s20, 1
        %s248 = scalar_select %p247, %s20, 1
        %p249 = scmp.lt.s32.totalorder %s21, 0
        %s250 = scalar_select %p249, %s21, 0
        %s251 = smul.addr %s250, 48
        %s252 = smul.addr %s248, 48
        %s253 = sadd.s32 %s251, %s252
        %s254 = smul.addr %s253, 4
        %s255 = scalar_lea.vmem %s0, %s254
      $region44: #{tpu_custom_call.1} parent=39 // pred_fallthru
        _
    $region40: #{tpu_custom_call.1} parent=5 // pred_fallthru
      _
    %p256 = scmp.le.s32.totalorder 1, %s13
    %p257 = scmp.lt.s32.totalorder %s13, 3
    %p258 = pnand %p256, %p257
    %p259 = pneg %p258
    // Predicated region
    $region45: #{tpu_custom_call.1} parent=5 // pred_check
      _
    $region46: #{tpu_custom_call.1} parent=5 // pred_check_branch
      %261 = sbr.rel (%p258) target = $region48
    $region47: #{tpu_custom_call.1} parent=5 // pred_region
      %s262 = ssub.s32 %s13, 1
      %p263 = scmp.lt.s32.totalorder %s22, 1
      %s264 = scalar_select %p263, %s22, 1
      %p265 = scmp.lt.s32.totalorder %s23, 0
      %s266 = scalar_select %p265, %s23, 0
      %s267 = smul.addr %s266, 48
      %s268 = smul.addr %s264, 48
      %s269 = sadd.s32 %s267, %s268
      %s270 = smul.addr %s269, 4
      %s271 = scalar_lea.vmem %s0, %s270
      %p272 = pneg %p53
      %p273 = pneg %p50
      %p274 = pneg %p74
      %p275 = pneg %p71
      %p276 = pneg %p95
      %p277 = pneg %p92
      %p278 = pneg %p116
      %p279 = pneg %p113
      %p280 = pneg %p137
      %p281 = pneg %p134
      %p282 = pneg %p158
      %p283 = pneg %p155
      %p284 = pneg %p179
      %p285 = pneg %p176
      %p286 = pneg %p207
      %p287 = pneg %p204
      %s288 = smul.u32 8, %s23
      %p289 = scmp.lt.s32.totalorder %s22, 1
      %s290 = scalar_select %p289, %s22, 1
      %p291 = scmp.lt.s32.totalorder %s288, 7
      %s292 = scalar_select %p291, %s288, 7
      %s293 = smul.addr %s290, 8
      %s294 = sadd.s32 %s292, %s293
      %s295 = smul.addr %s294, 8
      %s296 = scalar_lea.vmem %s7, %s295
      %p297 = scmp.lt.s32.totalorder %s22, 1
      %s298 = scalar_select %p297, %s22, 1
      %p299 = scmp.lt.s32.totalorder %s23, 0
      %s300 = scalar_select %p299, %s23, 0
      %s301 = smul.addr %s300, 48
      %s302 = smul.addr %s298, 48
      %s303 = sadd.s32 %s301, %s302
      %s304 = smul.addr %s303, 4
      %s305 = scalar_lea.vmem %s0, %s304
      %s306 = smul.u32 8, %s23
      %p307 = scmp.lt.s32.totalorder %s22, 1
      %s308 = scalar_select %p307, %s22, 1
      %p309 = scmp.lt.s32.totalorder %s306, 7
      %s310 = scalar_select %p309, %s306, 7
      %s311 = smul.addr %s308, 8
      %s312 = sadd.s32 %s310, %s311
      %s313 = smul.addr %s312, 8
      %s314 = scalar_lea.vmem %s7, %s313
      %s315 = smul.u32 8, %s23
      %v319 = vld [vmem:[%s305] sm:$0xf]
      %v320 = vld [vmem:[%s305 + $0x4] sm:$0xf]
      %v321 = vld [vmem:[%s305 + $0x8] sm:$0xf]
      %v322 = vld [vmem:[%s305 + $0xc] sm:$0xf]
      %v323 = vld [vmem:[%s305 + $0x10] sm:$0xf]
      %v324 = vld [vmem:[%s305 + $0x14] sm:$0xf]
      %v325 = vld [vmem:[%s305 + $0x18] sm:$0xf]
      %v326 = vld [vmem:[%s305 + $0x1c] sm:$0xf]
      %v327 = vld [vmem:[%s305 + $0x20] sm:$0xf]
      %v328 = vld [vmem:[%s305 + $0x24] sm:$0xf]
      %v329 = vld [vmem:[%s305 + $0x28] sm:$0xf]
      %v330 = vld [vmem:[%s305 + $0x2c] sm:$0xf]
      %v331 = vld [vmem:[%s305 + $0x30] sm:$0xf]
      %v332 = vld [vmem:[%s305 + $0x34] sm:$0xf]
      %v333 = vld [vmem:[%s305 + $0x38] sm:$0xf]
      %v334 = vld [vmem:[%s305 + $0x3c] sm:$0xf]
      %v335 = vld [vmem:[%s305 + $0x40] sm:$0xf]
      %v336 = vld [vmem:[%s305 + $0x44] sm:$0xf]
      %v337 = vld [vmem:[%s305 + $0x48] sm:$0xf]
      %v338 = vld [vmem:[%s305 + $0x4c] sm:$0xf]
      %v339 = vld [vmem:[%s305 + $0x50] sm:$0xf]
      %v340 = vld [vmem:[%s305 + $0x54] sm:$0xf]
      %v341 = vld [vmem:[%s305 + $0x58] sm:$0xf]
      %v342 = vld [vmem:[%s305 + $0x5c] sm:$0xf]
      %v343 = vld [vmem:[%s305 + $0x60] sm:$0xf]
      %v344 = vld [vmem:[%s305 + $0x64] sm:$0xf]
      %v345 = vld [vmem:[%s305 + $0x68] sm:$0xf]
      %v346 = vld [vmem:[%s305 + $0x6c] sm:$0xf]
      %v347 = vld [vmem:[%s305 + $0x70] sm:$0xf]
      %v348 = vld [vmem:[%s305 + $0x74] sm:$0xf]
      %v349 = vld [vmem:[%s305 + $0x78] sm:$0xf]
      %v350 = vld [vmem:[%s305 + $0x7c] sm:$0xf]
      %v351 = vld [vmem:[%s305 + $0x80] sm:$0xf]
      %v352 = vld [vmem:[%s305 + $0x84] sm:$0xf]
      %v353 = vld [vmem:[%s305 + $0x88] sm:$0xf]
      %v354 = vld [vmem:[%s305 + $0x8c] sm:$0xf]
      %v355 = vld [vmem:[%s305 + $0x90] sm:$0xf]
      %v356 = vld [vmem:[%s305 + $0x94] sm:$0xf]
      %v357 = vld [vmem:[%s305 + $0x98] sm:$0xf]
      %v358 = vld [vmem:[%s305 + $0x9c] sm:$0xf]
      %v359 = vld [vmem:[%s305 + $0xa0] sm:$0xf]
      %v360 = vld [vmem:[%s305 + $0xa4] sm:$0xf]
      %v361 = vld [vmem:[%s305 + $0xa8] sm:$0xf]
      %v362 = vld [vmem:[%s305 + $0xac] sm:$0xf]
      %v363 = vld [vmem:[%s305 + $0xb0] sm:$0xf]
      %v364 = vld [vmem:[%s305 + $0xb4] sm:$0xf]
      %v365 = vld [vmem:[%s305 + $0xb8] sm:$0xf]
      %v366 = vld [vmem:[%s305 + $0xbc] sm:$0xf]
      %v367 = vmax.bf16 %v319, %v331
      %v368 = vmax.bf16 %v320, %v332
      %v369 = vmax.bf16 %v321, %v333
      %v370 = vmax.bf16 %v322, %v334
      %v371 = vmax.bf16 %v323, %v335
      %v372 = vmax.bf16 %v324, %v336
      %v373 = vmax.bf16 %v325, %v337
      %v374 = vmax.bf16 %v326, %v338
      %v375 = vmax.bf16 %v327, %v339
      %v376 = vmax.bf16 %v328, %v340
      %v377 = vmax.bf16 %v329, %v341
      %v378 = vmax.bf16 %v330, %v342
      %v379 = vmax.bf16 %v343, %v355
      %v380 = vmax.bf16 %v344, %v356
      %v381 = vmax.bf16 %v345, %v357
      %v382 = vmax.bf16 %v346, %v358
      %v383 = vmax.bf16 %v347, %v359
      %v384 = vmax.bf16 %v348, %v360
      %v385 = vmax.bf16 %v349, %v361
      %v386 = vmax.bf16 %v350, %v362
      %v387 = vmax.bf16 %v351, %v363
      %v388 = vmax.bf16 %v352, %v364
      %v389 = vmax.bf16 %v353, %v365
      %v390 = vmax.bf16 %v354, %v366
      %v391 = vmax.bf16 %v367, %v379
      %v392 = vmax.bf16 %v368, %v380
      %v393 = vmax.bf16 %v369, %v381
      %v394 = vmax.bf16 %v370, %v382
      %v395 = vmax.bf16 %v371, %v383
      %v396 = vmax.bf16 %v372, %v384
      %v397 = vmax.bf16 %v373, %v385
      %v398 = vmax.bf16 %v374, %v386
      %v399 = vmax.bf16 %v375, %v387
      %v400 = vmax.bf16 %v376, %v388
      %v401 = vmax.bf16 %v377, %v389
      %v402 = vmax.bf16 %v378, %v390
      %v403 = vlaneseq
      %v404 = vshrl.u32 %v403, 7
      %v405 = vadd.s32 %v404, 8
      %v406 = vadd.s32 %v404, 16
      %v407 = vadd.s32 %v404, 24
      %v408 = vadd.s32 %v404, 32
      %v409 = vadd.s32 %v404, 40
      %v410 = vadd.s32 %v404, 48
      %v411 = vadd.s32 %v404, 56
      %v412 = vadd.s32 %v404, 64
      %v413 = vadd.s32 %v404, 72
      %v414 = vadd.s32 %v404, 80
      %v415 = vadd.s32 %v404, 88
      %vm416 = vcmp.lt.s32.totalorder %v404, 0
      %v417 = vsub.s32 0, %v404
      %v418 = vsel %vm416, %v417, %v404
      %v419 = vshrl.u32 %v418, 3
      %v420 = vand.u32 %v418, 7
      %v421 = vsub.s32 0, %v420
      %v422 = vsel %vm416, %v421, %v420
      %vm423 = vcmp.lt.s32.totalorder %v405, 0
      %v424 = vsub.s32 0, %v405
      %v425 = vsel %vm423, %v424, %v405
      %v426 = vshrl.u32 %v425, 3
      %v427 = vand.u32 %v425, 7
      %v428 = vsub.s32 0, %v427
      %v429 = vsel %vm423, %v428, %v427
      %vm430 = vcmp.lt.s32.totalorder %v406, 0
      %v431 = vsub.s32 0, %v406
      %v432 = vsel %vm430, %v431, %v406
      %v433 = vshrl.u32 %v432, 3
      %v434 = vand.u32 %v432, 7
      %v435 = vsub.s32 0, %v434
      %v436 = vsel %vm430, %v435, %v434
      %vm437 = vcmp.lt.s32.totalorder %v407, 0
      %v438 = vsub.s32 0, %v407
      %v439 = vsel %vm437, %v438, %v407
      %v440 = vshrl.u32 %v439, 3
      %v441 = vand.u32 %v439, 7
      %v442 = vsub.s32 0, %v441
      %v443 = vsel %vm437, %v442, %v441
      %vm444 = vcmp.lt.s32.totalorder %v408, 0
      %v445 = vsub.s32 0, %v408
      %v446 = vsel %vm444, %v445, %v408
      %v447 = vshrl.u32 %v446, 3
      %v448 = vand.u32 %v446, 7
      %v449 = vsub.s32 0, %v448
      %v450 = vsel %vm444, %v449, %v448
      %vm451 = vcmp.lt.s32.totalorder %v409, 0
      %v452 = vsub.s32 0, %v409
      %v453 = vsel %vm451, %v452, %v409
      %v454 = vshrl.u32 %v453, 3
      %v455 = vand.u32 %v453, 7
      %v456 = vsub.s32 0, %v455
      %v457 = vsel %vm451, %v456, %v455
      %vm458 = vcmp.lt.s32.totalorder %v410, 0
      %v459 = vsub.s32 0, %v410
      %v460 = vsel %vm458, %v459, %v410
      %v461 = vshrl.u32 %v460, 3
      %v462 = vand.u32 %v460, 7
      %v463 = vsub.s32 0, %v462
      %v464 = vsel %vm458, %v463, %v462
      %vm465 = vcmp.lt.s32.totalorder %v411, 0
      %v466 = vsub.s32 0, %v411
      %v467 = vsel %vm465, %v466, %v411
      %v468 = vshrl.u32 %v467, 3
      %v469 = vand.u32 %v467, 7
      %v470 = vsub.s32 0, %v469
      %v471 = vsel %vm465, %v470, %v469
      %vm472 = vcmp.lt.s32.totalorder %v412, 0
      %v473 = vsub.s32 0, %v412
      %v474 = vsel %vm472, %v473, %v412
      %v475 = vshrl.u32 %v474, 3
      %v476 = vand.u32 %v474, 7
      %v477 = vsub.s32 0, %v476
      %v478 = vsel %vm472, %v477, %v476
      %vm479 = vcmp.lt.s32.totalorder %v413, 0
      %v480 = vsub.s32 0, %v413
      %v481 = vsel %vm479, %v480, %v413
      %v482 = vshrl.u32 %v481, 3
      %v483 = vand.u32 %v481, 7
      %v484 = vsub.s32 0, %v483
      %v485 = vsel %vm479, %v484, %v483
      %vm486 = vcmp.lt.s32.totalorder %v414, 0
      %v487 = vsub.s32 0, %v414
      %v488 = vsel %vm486, %v487, %v414
      %v489 = vshrl.u32 %v488, 3
      %v490 = vand.u32 %v488, 7
      %v491 = vsub.s32 0, %v490
      %v492 = vsel %vm486, %v491, %v490
      %vm493 = vcmp.lt.s32.totalorder %v415, 0
      %v494 = vsub.s32 0, %v415
      %v495 = vsel %vm493, %v494, %v415
      %v496 = vshrl.u32 %v495, 3
      %v497 = vand.u32 %v495, 7
      %v498 = vsub.s32 0, %v497
      %v499 = vsel %vm493, %v498, %v497
      %vm500 = vcmp.ne.s32.totalorder %v422, 0
      %vm501 = vcmp.ne.s32.totalorder %v429, 0
      %vm502 = vcmp.ne.s32.totalorder %v436, 0
      %vm503 = vcmp.ne.s32.totalorder %v443, 0
      %vm504 = vcmp.ne.s32.totalorder %v450, 0
      %vm505 = vcmp.ne.s32.totalorder %v457, 0
      %vm506 = vcmp.ne.s32.totalorder %v464, 0
      %vm507 = vcmp.ne.s32.totalorder %v471, 0
      %vm508 = vcmp.ne.s32.totalorder %v478, 0
      %vm509 = vcmp.ne.s32.totalorder %v485, 0
      %vm510 = vcmp.ne.s32.totalorder %v492, 0
      %vm511 = vcmp.ne.s32.totalorder %v499, 0
      %vm512 = vcmp.lt.s32.totalorder %v422, 0
      %vm513 = vcmp.lt.s32.totalorder %v429, 0
      %vm514 = vcmp.lt.s32.totalorder %v436, 0
      %vm515 = vcmp.lt.s32.totalorder %v443, 0
      %vm516 = vcmp.lt.s32.totalorder %v450, 0
      %vm517 = vcmp.lt.s32.totalorder %v457, 0
      %vm518 = vcmp.lt.s32.totalorder %v464, 0
      %vm519 = vcmp.lt.s32.totalorder %v471, 0
      %vm520 = vcmp.lt.s32.totalorder %v478, 0
      %vm521 = vcmp.lt.s32.totalorder %v485, 0
      %vm522 = vcmp.lt.s32.totalorder %v492, 0
      %vm523 = vcmp.lt.s32.totalorder %v499, 0
      %vm524 = vmand %vm512, %vm500
      %vm525 = vmand %vm513, %vm501
      %vm526 = vmand %vm514, %vm502
      %vm527 = vmand %vm515, %vm503
      %vm528 = vmand %vm516, %vm504
      %vm529 = vmand %vm517, %vm505
      %vm530 = vmand %vm518, %vm506
      %vm531 = vmand %vm519, %vm507
      %vm532 = vmand %vm520, %vm508
      %vm533 = vmand %vm521, %vm509
      %vm534 = vmand %vm522, %vm510
      %vm535 = vmand %vm523, %vm511
      %v536 = vadd.s32 %v422, 8
      %v537 = vadd.s32 %v429, 8
      %v538 = vadd.s32 %v436, 8
      %v539 = vadd.s32 %v443, 8
      %v540 = vadd.s32 %v450, 8
      %v541 = vadd.s32 %v457, 8
      %v542 = vadd.s32 %v464, 8
      %v543 = vadd.s32 %v471, 8
      %v544 = vadd.s32 %v478, 8
      %v545 = vadd.s32 %v485, 8
      %v546 = vadd.s32 %v492, 8
      %v547 = vadd.s32 %v499, 8
      %v548 = vsel %vm524, %v536, %v422
      %v549 = vsel %vm525, %v537, %v429
      %v550 = vsel %vm526, %v538, %v436
      %v551 = vsel %vm527, %v539, %v443
      %v552 = vsel %vm528, %v540, %v450
      %v553 = vsel %vm529, %v541, %v457
      %v554 = vsel %vm530, %v542, %v464
      %v555 = vsel %vm531, %v543, %v471
      %v556 = vsel %vm532, %v544, %v478
      %v557 = vsel %vm533, %v545, %v485
      %v558 = vsel %vm534, %v546, %v492
      %v559 = vsel %vm535, %v547, %v499
      %v572 = vunpack.c.l.b16 %v391
      %v573 = vunpack.c.l.b16 %v392
      %v574 = vunpack.c.l.b16 %v393
      %v575 = vunpack.c.l.b16 %v394
      %v576 = vunpack.c.l.b16 %v395
      %v577 = vunpack.c.l.b16 %v396
      %v578 = vunpack.c.l.b16 %v397
      %v579 = vunpack.c.l.b16 %v398
      %v580 = vunpack.c.l.b16 %v399
      %v581 = vunpack.c.l.b16 %v400
      %v582 = vunpack.c.l.b16 %v401
      %v583 = vunpack.c.l.b16 %v402
      %v584 = vpack.c.b16 %v573, %v572
      %v585 = vpack.c.b16 %v575, %v574
      %v586 = vpack.c.b16 %v577, %v576
      %v587 = vpack.c.b16 %v579, %v578
      %v588 = vpack.c.b16 %v581, %v580
      %v589 = vpack.c.b16 %v583, %v582
      %vm596 = vcmask 31744
      %597 = vst.msk [vmem:[#allocation2] sm:$0xff] %vm596, %v584
      %598 = vst.msk [vmem:[#allocation2 + $0x8] sm:$0xff] %vm596, %v585
      %599 = vst.msk [vmem:[#allocation2 + $0x10] sm:$0xff] %vm596, %v586
      %600 = vst.msk [vmem:[#allocation2 + $0x18] sm:$0xff] %vm596, %v587
      %601 = vst.msk [vmem:[#allocation2 + $0x20] sm:$0xff] %vm596, %v588
      %602 = vst.msk [vmem:[#allocation2 + $0x28] sm:$0xff] %vm596, %v589
      %vm603 = vcmp.eq.s32.totalorder %v548, 7
      %vm604 = vcmp.eq.s32.totalorder %v549, 7
      %vm605 = vcmp.eq.s32.totalorder %v550, 7
      %vm606 = vcmp.eq.s32.totalorder %v551, 7
      %vm607 = vcmp.eq.s32.totalorder %v552, 7
      %vm608 = vcmp.eq.s32.totalorder %v553, 7
      %vm609 = vcmp.eq.s32.totalorder %v554, 7
      %vm610 = vcmp.eq.s32.totalorder %v555, 7
      %vm611 = vcmp.eq.s32.totalorder %v556, 7
      %vm612 = vcmp.eq.s32.totalorder %v557, 7
      %vm613 = vcmp.eq.s32.totalorder %v558, 7
      %vm614 = vcmp.eq.s32.totalorder %v559, 7
      %v615 = vsel %vm603, 1, 0
      %v616 = vsel %vm604, 1, 0
      %v617 = vsel %vm605, 1, 0
      %v618 = vsel %vm606, 1, 0
      %v619 = vsel %vm607, 1, 0
      %v620 = vsel %vm608, 1, 0
      %v621 = vsel %vm609, 1, 0
      %v622 = vsel %vm610, 1, 0
      %v623 = vsel %vm611, 1, 0
      %v624 = vsel %vm612, 1, 0
      %v625 = vsel %vm613, 1, 0
      %v626 = vsel %vm614, 1, 0
      %vm627 = vcmp.eq.s32.totalorder %v615, 1
      %vm628 = vcmp.eq.s32.totalorder %v616, 1
      %vm629 = vcmp.eq.s32.totalorder %v617, 1
      %vm630 = vcmp.eq.s32.totalorder %v618, 1
      %vm631 = vcmp.eq.s32.totalorder %v619, 1
      %vm632 = vcmp.eq.s32.totalorder %v620, 1
      %vm633 = vcmp.eq.s32.totalorder %v621, 1
      %vm634 = vcmp.eq.s32.totalorder %v622, 1
      %vm635 = vcmp.eq.s32.totalorder %v623, 1
      %vm636 = vcmp.eq.s32.totalorder %v624, 1
      %vm637 = vcmp.eq.s32.totalorder %v625, 1
      %vm638 = vcmp.eq.s32.totalorder %v626, 1
      %vm639 = vmpackc.low %vm627, %vm627
      %vm640 = vmpackc.low %vm628, %vm628
      %vm641 = vmpackc.low %vm629, %vm629
      %vm642 = vmpackc.low %vm630, %vm630
      %vm643 = vmpackc.low %vm631, %vm631
      %vm644 = vmpackc.low %vm632, %vm632
      %vm645 = vmpackc.low %vm633, %vm633
      %vm646 = vmpackc.low %vm634, %vm634
      %vm647 = vmpackc.low %vm635, %vm635
      %vm648 = vmpackc.low %vm636, %vm636
      %vm649 = vmpackc.low %vm637, %vm637
      %vm650 = vmpackc.low %vm638, %vm638
      %v651 = vsel %vm639, 0, %v391
      %v652 = vsel %vm640, 0, %v392
      %v653 = vsel %vm641, 0, %v393
      %v654 = vsel %vm642, 0, %v394
      %v655 = vsel %vm643, 0, %v395
      %v656 = vsel %vm644, 0, %v396
      %v657 = vsel %vm645, 0, %v397
      %v658 = vsel %vm646, 0, %v398
      %v659 = vsel %vm647, 0, %v399
      %v660 = vsel %vm648, 0, %v400
      %v661 = vsel %vm649, 0, %v401
      %v662 = vsel %vm650, 0, %v402
      %v675 = vunpack.c.l.b16 %v651
      %v676 = vunpack.c.l.b16 %v652
      %v677 = vunpack.c.l.b16 %v653
      %v678 = vunpack.c.l.b16 %v654
      %v679 = vunpack.c.l.b16 %v655
      %v680 = vunpack.c.l.b16 %v656
      %v681 = vunpack.c.l.b16 %v657
      %v682 = vunpack.c.l.b16 %v658
      %v683 = vunpack.c.l.b16 %v659
      %v684 = vunpack.c.l.b16 %v660
      %v685 = vunpack.c.l.b16 %v661
      %v686 = vunpack.c.l.b16 %v662
      %v687 = vpack.c.b16 %v676, %v675
      %v688 = vpack.c.b16 %v678, %v677
      %v689 = vpack.c.b16 %v680, %v679
      %v690 = vpack.c.b16 %v682, %v681
      %v691 = vpack.c.b16 %v684, %v683
      %v692 = vpack.c.b16 %v686, %v685
      %vm693 = vsmask.f32 256
      %v695 = vshrl.u32 %v687, 16
      %v697 = vrot.slane %v695, 7
      %v698 = vshll.u32 %v687, 16
      %v700 = vor.u32 %v697, %v698
      %v702 = vshrl.u32 %v688, 16
      %v704 = vrot.slane %v702, 7
      %v705 = vshll.u32 %v688, 16
      %v707 = vor.u32 %v704, %v705
      %v708 = vsel %vm693, %v697, %v707
      %v710 = vshrl.u32 %v689, 16
      %v712 = vrot.slane %v710, 7
      %v713 = vshll.u32 %v689, 16
      %v715 = vor.u32 %v712, %v713
      %v716 = vsel %vm693, %v704, %v715
      %v718 = vshrl.u32 %v690, 16
      %v720 = vrot.slane %v718, 7
      %v721 = vshll.u32 %v690, 16
      %v723 = vor.u32 %v720, %v721
      %v724 = vsel %vm693, %v712, %v723
      %v726 = vshrl.u32 %v691, 16
      %v728 = vrot.slane %v726, 7
      %v729 = vshll.u32 %v691, 16
      %v731 = vor.u32 %v728, %v729
      %v732 = vsel %vm693, %v720, %v731
      %v734 = vshrl.u32 %v692, 16
      %v736 = vrot.slane %v734, 7
      %v737 = vshll.u32 %v692, 16
      %v739 = vor.u32 %v736, %v737
      %v740 = vsel %vm693, %v728, %v739
      %741 = vrot.lane.b32.xlu0 %v700, 4
      %v742 = vpop.permute.xlu0 %741
      %743 = vrot.lane.b32.xlu0 %v708, 4
      %v744 = vpop.permute.xlu0 %743
      %745 = vrot.lane.b32.xlu0 %v716, 4
      %v746 = vpop.permute.xlu0 %745
      %747 = vrot.lane.b32.xlu0 %v724, 4
      %v748 = vpop.permute.xlu0 %747
      %749 = vrot.lane.b32.xlu0 %v732, 4
      %v750 = vpop.permute.xlu0 %749
      %751 = vrot.lane.b32.xlu0 %v740, 4
      %v752 = vpop.permute.xlu0 %751
      %vm759 = vcmask 64544
      %vm760 = vsmask.f32 7938
      %vm761 = vmand %vm759, %vm760
      %v762 = vld [vmem:[#allocation2] sm:$0xff]
      %v763 = vsel %vm761, %v742, %v762
      %764 = vst [vmem:[#allocation2] sm:$0xff] %v763
      %vm765 = vcmask 64544
      %766 = vst.msk [vmem:[#allocation2 + $0x8] sm:$0xff] %vm765, %v744
      %767 = vst.msk [vmem:[#allocation2 + $0x10] sm:$0xff] %vm765, %v746
      %768 = vst.msk [vmem:[#allocation2 + $0x18] sm:$0xff] %vm765, %v748
      %769 = vst.msk [vmem:[#allocation2 + $0x20] sm:$0xff] %vm765, %v750
      %770 = vst.msk [vmem:[#allocation2 + $0x28] sm:$0xff] %vm765, %v752
      %vm771 = vcmask 57376
      %vm772 = vmand %vm771, %vm693
      %v773 = vld [vmem:[#allocation2] sm:$0x1]
      %v774 = vsel %vm772, 0, %v773
      %775 = vst [vmem:[#allocation2] sm:$0x1] %v774
      %vm776 = vcmp.eq.s32.totalorder %v548, 0
      %vm777 = vcmp.eq.s32.totalorder %v549, 0
      %vm778 = vcmp.eq.s32.totalorder %v550, 0
      %vm779 = vcmp.eq.s32.totalorder %v551, 0
      %vm780 = vcmp.eq.s32.totalorder %v552, 0
      %vm781 = vcmp.eq.s32.totalorder %v553, 0
      %vm782 = vcmp.eq.s32.totalorder %v554, 0
      %vm783 = vcmp.eq.s32.totalorder %v555, 0
      %vm784 = vcmp.eq.s32.totalorder %v556, 0
      %vm785 = vcmp.eq.s32.totalorder %v557, 0
      %vm786 = vcmp.eq.s32.totalorder %v558, 0
      %vm787 = vcmp.eq.s32.totalorder %v559, 0
      %v788 = vsel %vm776, 1, 0
      %v789 = vsel %vm777, 1, 0
      %v790 = vsel %vm778, 1, 0
      %v791 = vsel %vm779, 1, 0
      %v792 = vsel %vm780, 1, 0
      %v793 = vsel %vm781, 1, 0
      %v794 = vsel %vm782, 1, 0
      %v795 = vsel %vm783, 1, 0
      %v796 = vsel %vm784, 1, 0
      %v797 = vsel %vm785, 1, 0
      %v798 = vsel %vm786, 1, 0
      %v799 = vsel %vm787, 1, 0
      %vm800 = vcmp.eq.s32.totalorder %v788, 1
      %vm801 = vcmp.eq.s32.totalorder %v789, 1
      %vm802 = vcmp.eq.s32.totalorder %v790, 1
      %vm803 = vcmp.eq.s32.totalorder %v791, 1
      %vm804 = vcmp.eq.s32.totalorder %v792, 1
      %vm805 = vcmp.eq.s32.totalorder %v793, 1
      %vm806 = vcmp.eq.s32.totalorder %v794, 1
      %vm807 = vcmp.eq.s32.totalorder %v795, 1
      %vm808 = vcmp.eq.s32.totalorder %v796, 1
      %vm809 = vcmp.eq.s32.totalorder %v797, 1
      %vm810 = vcmp.eq.s32.totalorder %v798, 1
      %vm811 = vcmp.eq.s32.totalorder %v799, 1
      %vm812 = vmpackc.low %vm800, %vm800
      %vm813 = vmpackc.low %vm801, %vm801
      %vm814 = vmpackc.low %vm802, %vm802
      %vm815 = vmpackc.low %vm803, %vm803
      %vm816 = vmpackc.low %vm804, %vm804
      %vm817 = vmpackc.low %vm805, %vm805
      %vm818 = vmpackc.low %vm806, %vm806
      %vm819 = vmpackc.low %vm807, %vm807
      %vm820 = vmpackc.low %vm808, %vm808
      %vm821 = vmpackc.low %vm809, %vm809
      %vm822 = vmpackc.low %vm810, %vm810
      %vm823 = vmpackc.low %vm811, %vm811
      %v824 = vsel %vm812, 0, %v391
      %v825 = vsel %vm813, 0, %v392
      %v826 = vsel %vm814, 0, %v393
      %v827 = vsel %vm815, 0, %v394
      %v828 = vsel %vm816, 0, %v395
      %v829 = vsel %vm817, 0, %v396
      %v830 = vsel %vm818, 0, %v397
      %v831 = vsel %vm819, 0, %v398
      %v832 = vsel %vm820, 0, %v399
      %v833 = vsel %vm821, 0, %v400
      %v834 = vsel %vm822, 0, %v401
      %v835 = vsel %vm823, 0, %v402
      %v848 = vunpack.c.l.b16 %v824
      %v849 = vunpack.c.l.b16 %v825
      %v850 = vunpack.c.l.b16 %v826
      %v851 = vunpack.c.l.b16 %v827
      %v852 = vunpack.c.l.b16 %v828
      %v853 = vunpack.c.l.b16 %v829
      %v854 = vunpack.c.l.b16 %v830
      %v855 = vunpack.c.l.b16 %v831
      %v856 = vunpack.c.l.b16 %v832
      %v857 = vunpack.c.l.b16 %v833
      %v858 = vunpack.c.l.b16 %v834
      %v859 = vunpack.c.l.b16 %v835
      %v860 = vpack.c.b16 %v849, %v848
      %v861 = vpack.c.b16 %v851, %v850
      %v862 = vpack.c.b16 %v853, %v852
      %v863 = vpack.c.b16 %v855, %v854
      %v864 = vpack.c.b16 %v857, %v856
      %v865 = vpack.c.b16 %v859, %v858
      %vm866 = vsmask.f32 7424
      %v868 = vshrl.u32 %v860, 16
      %v870 = vshll.u32 %v860, 16
      %v872 = vrot.slane %v870, 1
      %v873 = vor.u32 %v868, %v872
      %v875 = vshll.u32 %v861, 16
      %v877 = vrot.slane %v875, 1
      %v878 = vsel %vm866, %v873, %v877
      %v879 = vshrl.u32 %v861, 16
      %v881 = vor.u32 %v879, %v877
      %v883 = vshll.u32 %v862, 16
      %v885 = vrot.slane %v883, 1
      %v886 = vsel %vm866, %v881, %v885
      %v887 = vshrl.u32 %v862, 16
      %v889 = vor.u32 %v887, %v885
      %v891 = vshll.u32 %v863, 16
      %v893 = vrot.slane %v891, 1
      %v894 = vsel %vm866, %v889, %v893
      %v895 = vshrl.u32 %v863, 16
      %v897 = vor.u32 %v895, %v893
      %v899 = vshll.u32 %v864, 16
      %v901 = vrot.slane %v899, 1
      %v902 = vsel %vm866, %v897, %v901
      %v903 = vshrl.u32 %v864, 16
      %v905 = vor.u32 %v903, %v901
      %v907 = vshll.u32 %v865, 16
      %v909 = vrot.slane %v907, 1
      %v910 = vsel %vm866, %v905, %v909
      %v911 = vshrl.u32 %v865, 16
      %v913 = vor.u32 %v911, %v909
      %914 = vrot.lane.b32.xlu0 %v878, 8
      %v915 = vpop.permute.xlu0 %914
      %916 = vrot.lane.b32.xlu0 %v886, 8
      %v917 = vpop.permute.xlu0 %916
      %918 = vrot.lane.b32.xlu0 %v894, 8
      %v919 = vpop.permute.xlu0 %918
      %920 = vrot.lane.b32.xlu0 %v902, 8
      %v921 = vpop.permute.xlu0 %920
      %922 = vrot.lane.b32.xlu0 %v910, 8
      %v923 = vpop.permute.xlu0 %922
      %924 = vrot.lane.b32.xlu0 %v913, 8
      %v925 = vpop.permute.xlu0 %924
      %vm932 = vcmask 97344
      %933 = vst.msk [vmem:[#allocation2] sm:$0xff] %vm932, %v915
      %934 = vst.msk [vmem:[#allocation2 + $0x8] sm:$0xff] %vm932, %v917
      %935 = vst.msk [vmem:[#allocation2 + $0x10] sm:$0xff] %vm932, %v919
      %936 = vst.msk [vmem:[#allocation2 + $0x18] sm:$0xff] %vm932, %v921
      %937 = vst.msk [vmem:[#allocation2 + $0x20] sm:$0xff] %vm932, %v923
      %vm938 = vcmask 97344
      %vm939 = vmand %vm938, %vm866
      %v940 = vld [vmem:[#allocation2 + $0x28] sm:$0xff]
      %v941 = vsel %vm939, %v925, %v940
      %942 = vst [vmem:[#allocation2 + $0x28] sm:$0xff] %v941
      %vm943 = vcmask 97351
      %vm944 = vsmask.f32 7966
      %vm945 = vmand %vm943, %vm944
      %v946 = vld [vmem:[#allocation2 + $0x28] sm:$0x80]
      %v947 = vsel %vm945, 0, %v946
      %948 = vst [vmem:[#allocation2 + $0x28] sm:$0x80] %v947
      %v949 = vld [vmem:[#allocation2] sm:$0xff]
      %v950 = vld [vmem:[#allocation2 + $0x8] sm:$0xff]
      %v951 = vld [vmem:[#allocation2 + $0x10] sm:$0xff]
      %v952 = vld [vmem:[#allocation2 + $0x18] sm:$0xff]
      %v953 = vld [vmem:[#allocation2 + $0x20] sm:$0xff]
      %v954 = vld [vmem:[%s1] sm:$0xf]
      %v955 = vld [vmem:[%s1 + $0x4] sm:$0x3]
      %v956 = vld [vmem:[#allocation2] sm:$0xf0]
      %v957 = vld [vmem:[#allocation2 + $0x28] sm:$0xf]
      %s958 = scalar_lea.vmem %s1, 8
      %v959 = vld [vmem:[%s958] sm:$0xf]
      %v960 = vld [vmem:[%s958 + $0x4] sm:$0x3]
      %vm967 = vcmask 1043456
      %v968 = vrot.slane %v956, 4
      %v969 = vrot.slane %v950, 4
      %v970 = vsel %vm967, %v968, %v969
      %v971 = vrot.slane %v951, 4
      %v972 = vsel %vm967, %v969, %v971
      %v973 = vrot.slane %v952, 4
      %v974 = vsel %vm967, %v971, %v973
      %v975 = vrot.slane %v953, 4
      %v976 = vsel %vm967, %v973, %v975
      %v977 = vrot.slane %v957, 4
      %v978 = vsel %vm967, %v975, %v977
      %v981 = vunpack.c.l.b16 %v959
      %v982 = vunpack.c.l.b16 %v960
      %v983 = vpack.c.b16 %v982, %v981
      %vm984 = vcmask 97280
      %v986 = vsel %vm984, %v970, 0
      %v989 = vsel %vm984, %v972, 0
      %v992 = vsel %vm984, %v974, 0
      %v995 = vsel %vm984, %v976, 0
      %v998 = vsel %vm984, %v978, 0
      %vm1000 = vcmask 1045504
      %v1002 = vsel %vm1000, %v983, 0
      %1004 = vmatprep.subr.bf16.mxu0 0
      %1005 = vmatpush1.bf16.msra.mxu0 %v1002
      %1006 = vmatprep.subr.bf16.mxu0 0
      %1007 = vmatpush1.bf16.msra.mxu0 0
      %1008 = vmatprep.subr.bf16.mxu0 0
      %1009 = vmatpush1.bf16.msra.mxu0 0
      %1010 = vmatprep.subr.bf16.mxu0 0
      %1011 = vmatpush1.bf16.msra.mxu0 0
      %1012 = vmatprep.subr.bf16.mxu0 0
      %1013 = vmatpush1.bf16.msra.mxu0 0
      %1014 = vmatprep.subr.bf16.mxu0 0
      %1015 = vmatpush1.bf16.msra.mxu0 0
      %1016 = vmatprep.subr.bf16.mxu0 0
      %1017 = vmatpush1.bf16.msra.mxu0 0
      %1018 = vmatprep.subr.bf16.mxu0 0
      %1019 = vmatpush1.bf16.msra.mxu0 0
      %1020 = vmatprep.subr.bf16.mxu0 0
      %1021 = vmatpush1.bf16.msra.mxu0 0
      %1022 = vmatprep.subr.bf16.mxu0 0
      %1023 = vmatpush1.bf16.msra.mxu0 0
      %1024 = vmatprep.subr.bf16.mxu0 0
      %1025 = vmatpush1.bf16.msra.mxu0 0
      %1026 = vmatprep.subr.bf16.mxu0 0
      %1027 = vmatpush1.bf16.msra.mxu0 0
      %1028 = vmatprep.subr.bf16.mxu0 0
      %1029 = vmatpush1.bf16.msra.mxu0 0
      %1030 = vmatprep.subr.bf16.mxu0 0
      %1031 = vmatpush1.bf16.msra.mxu0 0
      %1032 = vmatprep.subr.bf16.mxu0 0
      %1033 = vmatpush1.bf16.msra.mxu0 0
      %1034 = vmatprep.subr.bf16.mxu0 0
      %1035 = vmatpush1.bf16.msra.mxu0 0
      %1036 = vmatprep.mubr.bf16.mxu0 0
      %1037 = vmatmul.mubr.bf16.gmra.mrb[0].mxu0 %v986
      %v1038 = vpop.f32.mrb[0].mxu0
      %v1039 = vadd.f32 0.0, %v1038
      %v1040 = vpop.f32.mrb[0].mxu0
      %v1041 = vpop.f32.mrb[0].mxu0
      %v1042 = vadd.f32 0.0, %v1041
      %v1043 = vpop.f32.mrb[0].mxu0
      %1044 = vmatprep.mubr.bf16.mxu0 0
      %1045 = vmatmul.mubr.bf16.gmra.mrb[0].mxu0 %v989
      %v1046 = vpop.f32.mrb[0].mxu0
      %v1047 = vadd.f32 0.0, %v1046
      %v1048 = vpop.f32.mrb[0].mxu0
      %v1049 = vpop.f32.mrb[0].mxu0
      %v1050 = vadd.f32 0.0, %v1049
      %v1051 = vpop.f32.mrb[0].mxu0
      %1052 = vmatprep.mubr.bf16.mxu0 0
      %1053 = vmatmul.mubr.bf16.gmra.mrb[0].mxu0 %v992
      %v1054 = vpop.f32.mrb[0].mxu0
      %v1055 = vadd.f32 0.0, %v1054
      %v1056 = vpop.f32.mrb[0].mxu0
      %v1057 = vpop.f32.mrb[0].mxu0
      %v1058 = vadd.f32 0.0, %v1057
      %v1059 = vpop.f32.mrb[0].mxu0
      %1060 = vmatprep.mubr.bf16.mxu0 0
      %1061 = vmatmul.mubr.bf16.gmra.mrb[0].mxu0 %v995
      %v1062 = vpop.f32.mrb[0].mxu0
      %v1063 = vadd.f32 0.0, %v1062
      %v1064 = vpop.f32.mrb[0].mxu0
      %v1065 = vpop.f32.mrb[0].mxu0
      %v1066 = vadd.f32 0.0, %v1065
      %v1067 = vpop.f32.mrb[0].mxu0
      %1068 = vmatprep.mubr.bf16.mxu0 0
      %1069 = vmatmul.mubr.bf16.gmra.mrb[0].mxu0 %v998
      %v1070 = vpop.f32.mrb[0].mxu0
      %v1071 = vadd.f32 0.0, %v1070
      %v1072 = vpop.f32.mrb[0].mxu0
      %v1073 = vpop.f32.mrb[0].mxu0
      %v1074 = vadd.f32 0.0, %v1073
      %v1075 = vpop.f32.mrb[0].mxu0
      %1076 = vdwg.mxu0
      %v1079 = vunpack.c.l.b16 %v954
      %v1080 = vunpack.c.l.b16 %v955
      %v1081 = vpack.c.b16 %v1080, %v1079
      %v1083 = vsel %vm984, %v949, 0
      %v1086 = vsel %vm984, %v950, 0
      %v1089 = vsel %vm984, %v951, 0
      %v1092 = vsel %vm984, %v952, 0
      %v1095 = vsel %vm984, %v953, 0
      %v1098 = vsel %vm1000, %v1081, 0
      %1100 = vmatprep.subr.bf16.mxu0 0
      %1101 = vmatpush1.bf16.msra.mxu0 %v1098
      %1102 = vmatprep.subr.bf16.mxu0 0
      %1103 = vmatpush1.bf16.msra.mxu0 0
      %1104 = vmatprep.subr.bf16.mxu0 0
      %1105 = vmatpush1.bf16.msra.mxu0 0
      %1106 = vmatprep.subr.bf16.mxu0 0
      %1107 = vmatpush1.bf16.msra.mxu0 0
      %1108 = vmatprep.subr.bf16.mxu0 0
      %1109 = vmatpush1.bf16.msra.mxu0 0
      %1110 = vmatprep.subr.bf16.mxu0 0
      %1111 = vmatpush1.bf16.msra.mxu0 0
      %1112 = vmatprep.subr.bf16.mxu0 0
      %1113 = vmatpush1.bf16.msra.mxu0 0
      %1114 = vmatprep.subr.bf16.mxu0 0
      %1115 = vmatpush1.bf16.msra.mxu0 0
      %1116 = vmatprep.subr.bf16.mxu0 0
      %1117 = vmatpush1.bf16.msra.mxu0 0
      %1118 = vmatprep.subr.bf16.mxu0 0
      %1119 = vmatpush1.bf16.msra.mxu0 0
      %1120 = vmatprep.subr.bf16.mxu0 0
      %1121 = vmatpush1.bf16.msra.mxu0 0
      %1122 = vmatprep.subr.bf16.mxu0 0
      %1123 = vmatpush1.bf16.msra.mxu0 0
      %1124 = vmatprep.subr.bf16.mxu0 0
      %1125 = vmatpush1.bf16.msra.mxu0 0
      %1126 = vmatprep.subr.bf16.mxu0 0
      %1127 = vmatpush1.bf16.msra.mxu0 0
      %1128 = vmatprep.subr.bf16.mxu0 0
      %1129 = vmatpush1.bf16.msra.mxu0 0
      %1130 = vmatprep.subr.bf16.mxu0 0
      %1131 = vmatpush1.bf16.msra.mxu0 0
      %1132 = vmatprep.mubr.bf16.mxu0 0
      %1133 = vmatmul.mubr.bf16.gmra.mrb[0].mxu0 %v1083
      %v1134 = vpop.f32.mrb[0].mxu0
      %v1135 = vadd.f32 %v1039, %v1134
      %v1136 = vpop.f32.mrb[0].mxu0
      %v1137 = vpop.f32.mrb[0].mxu0
      %v1138 = vadd.f32 %v1042, %v1137
      %v1139 = vpop.f32.mrb[0].mxu0
      %1140 = vmatprep.mubr.bf16.mxu0 0
      %1141 = vmatmul.mubr.bf16.gmra.mrb[0].mxu0 %v1086
      %v1142 = vpop.f32.mrb[0].mxu0
      %v1143 = vadd.f32 %v1047, %v1142
      %v1144 = vpop.f32.mrb[0].mxu0
      %v1145 = vpop.f32.mrb[0].mxu0
      %v1146 = vadd.f32 %v1050, %v1145
      %v1147 = vpop.f32.mrb[0].mxu0
      %1148 = vmatprep.mubr.bf16.mxu0 0
      %1149 = vmatmul.mubr.bf16.gmra.mrb[0].mxu0 %v1089
      %v1150 = vpop.f32.mrb[0].mxu0
      %v1151 = vadd.f32 %v1055, %v1150
      %v1152 = vpop.f32.mrb[0].mxu0
      %v1153 = vpop.f32.mrb[0].mxu0
      %v1154 = vadd.f32 %v1058, %v1153
      %v1155 = vpop.f32.mrb[0].mxu0
      %1156 = vmatprep.mubr.bf16.mxu0 0
      %1157 = vmatmul.mubr.bf16.gmra.mrb[0].mxu0 %v1092
      %v1158 = vpop.f32.mrb[0].mxu0
      %v1159 = vadd.f32 %v1063, %v1158
      %v1160 = vpop.f32.mrb[0].mxu0
      %v1161 = vpop.f32.mrb[0].mxu0
      %v1162 = vadd.f32 %v1066, %v1161
      %v1163 = vpop.f32.mrb[0].mxu0
      %1164 = vmatprep.mubr.bf16.mxu0 0
      %1165 = vmatmul.mubr.bf16.gmra.mrb[0].mxu0 %v1095
      %v1166 = vpop.f32.mrb[0].mxu0
      %v1167 = vadd.f32 %v1071, %v1166
      %v1168 = vpop.f32.mrb[0].mxu0
      %v1169 = vpop.f32.mrb[0].mxu0
      %v1170 = vadd.f32 %v1074, %v1169
      %v1171 = vpop.f32.mrb[0].mxu0
      %1172 = vdwg.mxu0
      %v1173 = vld [vmem:[#allocation2 + $0x28] sm:$0xff]
      %s1174 = scalar_lea.vmem %s1, 16
      %v1175 = vld [vmem:[%s1174] sm:$0xf]
      %v1176 = vld [vmem:[%s1174 + $0x4] sm:$0x3]
      %v1179 = vunpack.c.l.b16 %v1175
      %v1180 = vunpack.c.l.b16 %v1176
      %v1181 = vpack.c.b16 %v1180, %v1179
      %v1183 = vsel %vm984, %v1173, 0
      %v1186 = vsel %vm1000, %v1181, 0
      %1188 = vmatprep.subr.bf16.mxu0 0
      %1189 = vmatpush1.bf16.msra.mxu0 %v1186
      %1190 = vmatprep.subr.bf16.mxu0 0
      %1191 = vmatpush1.bf16.msra.mxu0 0
      %1192 = vmatprep.subr.bf16.mxu0 0
      %1193 = vmatpush1.bf16.msra.mxu0 0
      %1194 = vmatprep.subr.bf16.mxu0 0
      %1195 = vmatpush1.bf16.msra.mxu0 0
      %1196 = vmatprep.subr.bf16.mxu0 0
      %1197 = vmatpush1.bf16.msra.mxu0 0
      %1198 = vmatprep.subr.bf16.mxu0 0
      %1199 = vmatpush1.bf16.msra.mxu0 0
      %1200 = vmatprep.subr.bf16.mxu0 0
      %1201 = vmatpush1.bf16.msra.mxu0 0
      %1202 = vmatprep.subr.bf16.mxu0 0
      %1203 = vmatpush1.bf16.msra.mxu0 0
      %1204 = vmatprep.subr.bf16.mxu0 0
      %1205 = vmatpush1.bf16.msra.mxu0 0
      %1206 = vmatprep.subr.bf16.mxu0 0
      %1207 = vmatpush1.bf16.msra.mxu0 0
      %1208 = vmatprep.subr.bf16.mxu0 0
      %1209 = vmatpush1.bf16.msra.mxu0 0
      %1210 = vmatprep.subr.bf16.mxu0 0
      %1211 = vmatpush1.bf16.msra.mxu0 0
      %1212 = vmatprep.subr.bf16.mxu0 0
      %1213 = vmatpush1.bf16.msra.mxu0 0
      %1214 = vmatprep.subr.bf16.mxu0 0
      %1215 = vmatpush1.bf16.msra.mxu0 0
      %1216 = vmatprep.subr.bf16.mxu0 0
      %1217 = vmatpush1.bf16.msra.mxu0 0
      %1218 = vmatprep.subr.bf16.mxu0 0
      %1219 = vmatpush1.bf16.msra.mxu0 0
      %1220 = vmatprep.mubr.bf16.mxu0 0
      %1221 = vmatmul.mubr.bf16.gmra.mrb[0].mxu0 %v1086
      %v1222 = vpop.f32.mrb[0].mxu0
      %v1223 = vadd.f32 0.0, %v1222
      %v1224 = vpop.f32.mrb[0].mxu0
      %v1225 = vpop.f32.mrb[0].mxu0
      %v1226 = vadd.f32 0.0, %v1225
      %v1227 = vpop.f32.mrb[0].mxu0
      %1228 = vmatprep.mubr.bf16.mxu0 0
      %1229 = vmatmul.mubr.bf16.gmra.mrb[0].mxu0 %v1089
      %v1230 = vpop.f32.mrb[0].mxu0
      %v1231 = vadd.f32 0.0, %v1230
      %v1232 = vpop.f32.mrb[0].mxu0
      %v1233 = vpop.f32.mrb[0].mxu0
      %v1234 = vadd.f32 0.0, %v1233
      %v1235 = vpop.f32.mrb[0].mxu0
      %1236 = vmatprep.mubr.bf16.mxu0 0
      %1237 = vmatmul.mubr.bf16.gmra.mrb[0].mxu0 %v1092
      %v1238 = vpop.f32.mrb[0].mxu0
      %v1239 = vadd.f32 0.0, %v1238
      %v1240 = vpop.f32.mrb[0].mxu0
      %v1241 = vpop.f32.mrb[0].mxu0
      %v1242 = vadd.f32 0.0, %v1241
      %v1243 = vpop.f32.mrb[0].mxu0
      %1244 = vmatprep.mubr.bf16.mxu0 0
      %1245 = vmatmul.mubr.bf16.gmra.mrb[0].mxu0 %v1095
      %v1246 = vpop.f32.mrb[0].mxu0
      %v1247 = vadd.f32 0.0, %v1246
      %v1248 = vpop.f32.mrb[0].mxu0
      %v1249 = vpop.f32.mrb[0].mxu0
      %v1250 = vadd.f32 0.0, %v1249
      %v1251 = vpop.f32.mrb[0].mxu0
      %1252 = vmatprep.mubr.bf16.mxu0 0
      %1253 = vmatmul.mubr.bf16.gmra.mrb[0].mxu0 %v1183
      %v1254 = vpop.f32.mrb[0].mxu0
      %v1255 = vadd.f32 0.0, %v1254
      %v1256 = vpop.f32.mrb[0].mxu0
      %v1257 = vpop.f32.mrb[0].mxu0
      %v1258 = vadd.f32 0.0, %v1257
      %v1259 = vpop.f32.mrb[0].mxu0
      %1260 = vdwg.mxu0
      %v1261 = vadd.f32 %v1135, %v1223
      %v1262 = vadd.f32 %v1138, %v1226
      %v1263 = vadd.f32 %v1143, %v1231
      %v1264 = vadd.f32 %v1146, %v1234
      %v1265 = vadd.f32 %v1151, %v1239
      %v1266 = vadd.f32 %v1154, %v1242
      %v1267 = vadd.f32 %v1159, %v1247
      %v1268 = vadd.f32 %v1162, %v1250
      %v1269 = vadd.f32 %v1167, %v1255
      %v1270 = vadd.f32 %v1170, %v1258
      %v1271 = vld [vmem:[%s2] sm:$0x1]
      %v1273 = vlaneseq
      %v1274 = vshrl.u32 %v1273, 7
      %v1275 = vsub.s32 0, %v1274
      %v1276 = vrot.slane %v1271, %v1275
      %v1278 = vmul.f32 %v1261, %v1276
      %v1279 = vmul.f32 %v1262, %v1276
      %v1280 = vmul.f32 %v1263, %v1276
      %v1281 = vmul.f32 %v1264, %v1276
      %v1282 = vmul.f32 %v1265, %v1276
      %v1283 = vmul.f32 %v1266, %v1276
      %v1284 = vmul.f32 %v1267, %v1276
      %v1285 = vmul.f32 %v1268, %v1276
      %v1286 = vmul.f32 %v1269, %v1276
      %v1287 = vmul.f32 %v1270, %v1276
      %v1288 = vld [vmem:[%s3] sm:$0x1]
      %v1290 = vlaneseq
      %v1291 = vshrl.u32 %v1290, 7
      %v1292 = vsub.s32 0, %v1291
      %v1293 = vrot.slane %v1288, %v1292
      %v1295 = vadd.f32 %v1278, %v1293
      %v1296 = vadd.f32 %v1279, %v1293
      %v1297 = vadd.f32 %v1280, %v1293
      %v1298 = vadd.f32 %v1281, %v1293
      %v1299 = vadd.f32 %v1282, %v1293
      %v1300 = vadd.f32 %v1283, %v1293
      %v1301 = vadd.f32 %v1284, %v1293
      %v1302 = vadd.f32 %v1285, %v1293
      %v1303 = vadd.f32 %v1286, %v1293
      %v1304 = vadd.f32 %v1287, %v1293
      %v1305 = vmax.f32 %v1295, 0.0
      %v1306 = vmax.f32 %v1296, 0.0
      %v1307 = vmax.f32 %v1297, 0.0
      %v1308 = vmax.f32 %v1298, 0.0
      %v1309 = vmax.f32 %v1299, 0.0
      %v1310 = vmax.f32 %v1300, 0.0
      %v1311 = vmax.f32 %v1301, 0.0
      %v1312 = vmax.f32 %v1302, 0.0
      %v1313 = vmax.f32 %v1303, 0.0
      %v1314 = vmax.f32 %v1304, 0.0
      %v1315 = vpack.c.bf16 %v1306, %v1305
      %v1316 = vpack.c.bf16 %v1308, %v1307
      %v1317 = vpack.c.bf16 %v1310, %v1309
      %v1318 = vpack.c.bf16 %v1312, %v1311
      %v1319 = vpack.c.bf16 %v1314, %v1313
      %vm1320 = vcmask 64512
      %1321 = vst.msk [vmem:[#allocation3] sm:$0xff] %vm1320, %v1315
      %1322 = vst.msk [vmem:[#allocation3 + $0x8] sm:$0xff] %vm1320, %v1316
      %1323 = vst.msk [vmem:[#allocation3 + $0x10] sm:$0xff] %vm1320, %v1317
      %1324 = vst.msk [vmem:[#allocation3 + $0x18] sm:$0xff] %vm1320, %v1318
      %1325 = vst.msk [vmem:[#allocation3 + $0x20] sm:$0xff] %vm1320, %v1319
      %v1326 = vsel %vm639, 65537, 0
      %v1327 = vsel %vm640, 65537, 0
      %v1328 = vsel %vm641, 65537, 0
      %v1329 = vsel %vm642, 65537, 0
      %v1330 = vsel %vm643, 65537, 0
      %v1331 = vsel %vm644, 65537, 0
      %v1332 = vsel %vm645, 65537, 0
      %v1333 = vsel %vm646, 65537, 0
      %v1334 = vsel %vm647, 65537, 0
      %v1335 = vsel %vm648, 65537, 0
      %v1336 = vunpack.c.l.b16 %v1326
      %v1337 = vunpack.c.l.b16 %v1327
      %v1338 = vunpack.c.l.b16 %v1328
      %v1339 = vunpack.c.l.b16 %v1329
      %v1340 = vunpack.c.l.b16 %v1330
      %v1341 = vunpack.c.l.b16 %v1331
      %v1342 = vunpack.c.l.b16 %v1332
      %v1343 = vunpack.c.l.b16 %v1333
      %v1344 = vunpack.c.l.b16 %v1334
      %v1345 = vunpack.c.l.b16 %v1335
      %v1346 = vpack.c.b16 %v1337, %v1336
      %v1347 = vpack.c.b16 %v1339, %v1338
      %v1348 = vpack.c.b16 %v1341, %v1340
      %v1349 = vpack.c.b16 %v1343, %v1342
      %v1350 = vpack.c.b16 %v1345, %v1344
      %vm1351 = vcmp.ne.s16.totalorder %v1346, 0
      %vm1352 = vcmp.ne.s16.totalorder %v1347, 0
      %vm1353 = vcmp.ne.s16.totalorder %v1348, 0
      %vm1354 = vcmp.ne.s16.totalorder %v1349, 0
      %vm1355 = vcmp.ne.s16.totalorder %v1350, 0
      %v1356 = vsel %vm1351, 0, %v1315
      %v1357 = vsel %vm1352, 0, %v1316
      %v1358 = vsel %vm1353, 0, %v1317
      %v1359 = vsel %vm1354, 0, %v1318
      %v1360 = vsel %vm1355, 0, %v1319
      %v1362 = vshrl.u32 %v1356, 16
      %v1364 = vrot.slane %v1362, 7
      %v1365 = vshll.u32 %v1356, 16
      %v1367 = vor.u32 %v1364, %v1365
      %v1369 = vshrl.u32 %v1357, 16
      %v1371 = vrot.slane %v1369, 7
      %v1372 = vshll.u32 %v1357, 16
      %v1374 = vor.u32 %v1371, %v1372
      %v1375 = vsel %vm693, %v1364, %v1374
      %v1377 = vshrl.u32 %v1358, 16
      %v1379 = vrot.slane %v1377, 7
      %v1380 = vshll.u32 %v1358, 16
      %v1382 = vor.u32 %v1379, %v1380
      %v1383 = vsel %vm693, %v1371, %v1382
      %v1385 = vshrl.u32 %v1359, 16
      %v1387 = vrot.slane %v1385, 7
      %v1388 = vshll.u32 %v1359, 16
      %v1390 = vor.u32 %v1387, %v1388
      %v1391 = vsel %vm693, %v1379, %v1390
      %v1393 = vshrl.u32 %v1360, 16
      %v1395 = vrot.slane %v1393, 7
      %v1396 = vshll.u32 %v1360, 16
      %v1398 = vor.u32 %v1395, %v1396
      %v1399 = vsel %vm693, %v1387, %v1398
      %1400 = vrot.lane.b32.xlu0 %v1367, 8
      %v1401 = vpop.permute.xlu0 %1400
      %1402 = vrot.lane.b32.xlu0 %v1375, 8
      %v1403 = vpop.permute.xlu0 %1402
      %1404 = vrot.lane.b32.xlu0 %v1383, 8
      %v1405 = vpop.permute.xlu0 %1404
      %1406 = vrot.lane.b32.xlu0 %v1391, 8
      %v1407 = vpop.permute.xlu0 %1406
      %1408 = vrot.lane.b32.xlu0 %v1399, 8
      %v1409 = vpop.permute.xlu0 %1408
      %vm1415 = vcmask 130112
      %vm1416 = vmand %vm1415, %vm760
      %v1417 = vld [vmem:[#allocation3] sm:$0xff]
      %v1418 = vsel %vm1416, %v1401, %v1417
      %1419 = vst [vmem:[#allocation3] sm:$0xff] %v1418
      %vm1420 = vcmask 130112
      %1421 = vst.msk [vmem:[#allocation3 + $0x8] sm:$0xff] %vm1420, %v1403
      %1422 = vst.msk [vmem:[#allocation3 + $0x10] sm:$0xff] %vm1420, %v1405
      %1423 = vst.msk [vmem:[#allocation3 + $0x18] sm:$0xff] %vm1420, %v1407
      %1424 = vst.msk [vmem:[#allocation3 + $0x20] sm:$0xff] %vm1420, %v1409
      %vm1425 = vcmask 122944
      %vm1426 = vmand %vm1425, %vm693
      %v1427 = vld [vmem:[#allocation3] sm:$0x1]
      %v1428 = vsel %vm1426, 0, %v1427
      %1429 = vst [vmem:[#allocation3] sm:$0x1] %v1428
      %v1430 = vsel %vm812, 65537, 0
      %v1431 = vsel %vm813, 65537, 0
      %v1432 = vsel %vm814, 65537, 0
      %v1433 = vsel %vm815, 65537, 0
      %v1434 = vsel %vm816, 65537, 0
      %v1435 = vsel %vm817, 65537, 0
      %v1436 = vsel %vm818, 65537, 0
      %v1437 = vsel %vm819, 65537, 0
      %v1438 = vsel %vm820, 65537, 0
      %v1439 = vsel %vm821, 65537, 0
      %v1440 = vunpack.c.l.b16 %v1430
      %v1441 = vunpack.c.l.b16 %v1431
      %v1442 = vunpack.c.l.b16 %v1432
      %v1443 = vunpack.c.l.b16 %v1433
      %v1444 = vunpack.c.l.b16 %v1434
      %v1445 = vunpack.c.l.b16 %v1435
      %v1446 = vunpack.c.l.b16 %v1436
      %v1447 = vunpack.c.l.b16 %v1437
      %v1448 = vunpack.c.l.b16 %v1438
      %v1449 = vunpack.c.l.b16 %v1439
      %v1450 = vpack.c.b16 %v1441, %v1440
      %v1451 = vpack.c.b16 %v1443, %v1442
      %v1452 = vpack.c.b16 %v1445, %v1444
      %v1453 = vpack.c.b16 %v1447, %v1446
      %v1454 = vpack.c.b16 %v1449, %v1448
      %vm1455 = vcmp.ne.s16.totalorder %v1450, 0
      %vm1456 = vcmp.ne.s16.totalorder %v1451, 0
      %vm1457 = vcmp.ne.s16.totalorder %v1452, 0
      %vm1458 = vcmp.ne.s16.totalorder %v1453, 0
      %vm1459 = vcmp.ne.s16.totalorder %v1454, 0
      %v1460 = vsel %vm1455, 0, %v1315
      %v1461 = vsel %vm1456, 0, %v1316
      %v1462 = vsel %vm1457, 0, %v1317
      %v1463 = vsel %vm1458, 0, %v1318
      %v1464 = vsel %vm1459, 0, %v1319
      %v1466 = vshrl.u32 %v1460, 16
      %v1468 = vshll.u32 %v1460, 16
      %v1470 = vrot.slane %v1468, 1
      %v1471 = vor.u32 %v1466, %v1470
      %v1473 = vshll.u32 %v1461, 16
      %v1475 = vrot.slane %v1473, 1
      %v1476 = vsel %vm866, %v1471, %v1475
      %v1477 = vshrl.u32 %v1461, 16
      %v1479 = vor.u32 %v1477, %v1475
      %v1481 = vshll.u32 %v1462, 16
      %v1483 = vrot.slane %v1481, 1
      %v1484 = vsel %vm866, %v1479, %v1483
      %v1485 = vshrl.u32 %v1462, 16
      %v1487 = vor.u32 %v1485, %v1483
      %v1489 = vshll.u32 %v1463, 16
      %v1491 = vrot.slane %v1489, 1
      %v1492 = vsel %vm866, %v1487, %v1491
      %v1493 = vshrl.u32 %v1463, 16
      %v1495 = vor.u32 %v1493, %v1491
      %v1497 = vshll.u32 %v1464, 16
      %v1499 = vrot.slane %v1497, 1
      %v1500 = vsel %vm866, %v1495, %v1499
      %v1501 = vshrl.u32 %v1464, 16
      %v1503 = vor.u32 %v1501, %v1499
      %1504 = vrot.lane.b32.xlu0 %v1476, 16
      %v1505 = vpop.permute.xlu0 %1504
      %1506 = vrot.lane.b32.xlu0 %v1484, 16
      %v1507 = vpop.permute.xlu0 %1506
      %1508 = vrot.lane.b32.xlu0 %v1492, 16
      %v1509 = vpop.permute.xlu0 %1508
      %1510 = vrot.lane.b32.xlu0 %v1500, 16
      %v1511 = vpop.permute.xlu0 %1510
      %1512 = vrot.lane.b32.xlu0 %v1503, 16
      %v1513 = vpop.permute.xlu0 %1512
      %vm1519 = vcmask 195712
      %1520 = vst.msk [vmem:[#allocation3] sm:$0xff] %vm1519, %v1505
      %1521 = vst.msk [vmem:[#allocation3 + $0x8] sm:$0xff] %vm1519, %v1507
      %1522 = vst.msk [vmem:[#allocation3 + $0x10] sm:$0xff] %vm1519, %v1509
      %1523 = vst.msk [vmem:[#allocation3 + $0x18] sm:$0xff] %vm1519, %v1511
      %vm1524 = vcmask 195712
      %vm1525 = vmand %vm1524, %vm866
      %v1526 = vld [vmem:[#allocation3 + $0x20] sm:$0xff]
      %v1527 = vsel %vm1525, %v1513, %v1526
      %1528 = vst [vmem:[#allocation3 + $0x20] sm:$0xff] %v1527
      %vm1529 = vcmask 195719
      %vm1530 = vmand %vm1529, %vm944
      %v1531 = vld [vmem:[#allocation3 + $0x20] sm:$0x80]
      %v1532 = vsel %vm1530, 0, %v1531
      %1533 = vst [vmem:[#allocation3 + $0x20] sm:$0x80] %v1532
      %p1534 = scmp.eq.s32.totalorder %s23, 0
      // Predicated region
      $region49: #{tpu_custom_call.1} parent=47 // pred_check
        %p1535 = pneg %p1534
      $region50: #{tpu_custom_call.1} parent=47 // pred_check_branch
        %1537 = sbr.rel (%p1535) target = $region52
      $region51: #{tpu_custom_call.1} parent=47 // pred_region
        %vm1538 = vcmask 191488
        %1539 = vst.msk [vmem:[#allocation3] sm:$0xf] %vm1538, 0
        %vm1540 = vcmask 195588
        %1541 = vst.msk [vmem:[#allocation3 + $0x20] sm:$0xf0] %vm1540, 0
      $region52: #{tpu_custom_call.1} parent=47 // pred_fallthru
        _
      %v1542 = vld [vmem:[#allocation3] sm:$0xff]
      %v1543 = vld [vmem:[#allocation3 + $0x8] sm:$0xff]
      %v1544 = vld [vmem:[#allocation3 + $0x10] sm:$0xff]
      %v1545 = vld [vmem:[#allocation3 + $0x18] sm:$0xff]
      %v1546 = vld [vmem:[%s4] sm:$0xf]
      %v1547 = vld [vmem:[%s4 + $0x4] sm:$0xf]
      %v1548 = vld [vmem:[%s4 + $0x8] sm:$0xf]
      %v1549 = vld [vmem:[#allocation3] sm:$0xf0]
      %v1550 = vld [vmem:[#allocation3 + $0x20] sm:$0xf]
      %s1551 = scalar_lea.vmem %s4, 12
      %v1552 = vld [vmem:[%s1551] sm:$0xf]
      %v1553 = vld [vmem:[%s1551 + $0x4] sm:$0xf]
      %v1554 = vld [vmem:[%s1551 + $0x8] sm:$0xf]
      %v1560 = vrot.slane %v1549, 4
      %v1561 = vrot.slane %v1543, 4
      %v1562 = vsel %vm967, %v1560, %v1561
      %v1563 = vrot.slane %v1544, 4
      %v1564 = vsel %vm967, %v1561, %v1563
      %v1565 = vrot.slane %v1545, 4
      %v1566 = vsel %vm967, %v1563, %v1565
      %v1567 = vrot.slane %v1550, 4
      %v1568 = vsel %vm967, %v1565, %v1567
      %v1572 = vunpack.c.l.b16 %v1552
      %v1573 = vunpack.c.l.b16 %v1553
      %v1574 = vunpack.c.l.b16 %v1554
      %v1575 = vpack.c.b16 %v1573, %v1572
      %v1576 = vpack.c.b16 %v1574, %v1574
      %vm1578 = vcmask 195584
      %v1580 = vsel %vm1578, %v1562, 0
      %v1583 = vsel %vm1578, %v1564, 0
      %v1586 = vsel %vm1578, %v1566, 0
      %v1589 = vsel %vm1578, %v1568, 0
      %vm1591 = vcmask 1043456
      %v1593 = vsel %vm1591, %v1576, 0
      %1595 = vmatprep.subr.bf16.mxu0 0
      %1596 = vmatpush1.bf16.msra.mxu0 %v1575
      %1597 = vmatprep.subr.bf16.mxu0 0
      %1598 = vmatpush1.bf16.msra.mxu0 %v1593
      %1599 = vmatprep.subr.bf16.mxu0 0
      %1600 = vmatpush1.bf16.msra.mxu0 0
      %1601 = vmatprep.subr.bf16.mxu0 0
      %1602 = vmatpush1.bf16.msra.mxu0 0
      %1603 = vmatprep.subr.bf16.mxu0 0
      %1604 = vmatpush1.bf16.msra.mxu0 0
      %1605 = vmatprep.subr.bf16.mxu0 0
      %1606 = vmatpush1.bf16.msra.mxu0 0
      %1607 = vmatprep.subr.bf16.mxu0 0
      %1608 = vmatpush1.bf16.msra.mxu0 0
      %1609 = vmatprep.subr.bf16.mxu0 0
      %1610 = vmatpush1.bf16.msra.mxu0 0
      %1611 = vmatprep.subr.bf16.mxu0 0
      %1612 = vmatpush1.bf16.msra.mxu0 0
      %1613 = vmatprep.subr.bf16.mxu0 0
      %1614 = vmatpush1.bf16.msra.mxu0 0
      %1615 = vmatprep.subr.bf16.mxu0 0
      %1616 = vmatpush1.bf16.msra.mxu0 0
      %1617 = vmatprep.subr.bf16.mxu0 0
      %1618 = vmatpush1.bf16.msra.mxu0 0
      %1619 = vmatprep.subr.bf16.mxu0 0
      %1620 = vmatpush1.bf16.msra.mxu0 0
      %1621 = vmatprep.subr.bf16.mxu0 0
      %1622 = vmatpush1.bf16.msra.mxu0 0
      %1623 = vmatprep.subr.bf16.mxu0 0
      %1624 = vmatpush1.bf16.msra.mxu0 0
      %1625 = vmatprep.subr.bf16.mxu0 0
      %1626 = vmatpush1.bf16.msra.mxu0 0
      %1627 = vmatprep.mubr.bf16.mxu0 0
      %1628 = vmatmul.mubr.bf16.gmra.mrb[0].mxu0 %v1580
      %v1629 = vpop.f32.mrb[0].mxu0
      %v1630 = vadd.f32 0.0, %v1629
      %v1631 = vpop.f32.mrb[0].mxu0
      %v1632 = vpop.f32.mrb[0].mxu0
      %v1633 = vadd.f32 0.0, %v1632
      %v1634 = vpop.f32.mrb[0].mxu0
      %1635 = vmatprep.mubr.bf16.mxu0 0
      %1636 = vmatmul.mubr.bf16.gmra.mrb[0].mxu0 %v1583
      %v1637 = vpop.f32.mrb[0].mxu0
      %v1638 = vadd.f32 0.0, %v1637
      %v1639 = vpop.f32.mrb[0].mxu0
      %v1640 = vpop.f32.mrb[0].mxu0
      %v1641 = vadd.f32 0.0, %v1640
      %v1642 = vpop.f32.mrb[0].mxu0
      %1643 = vmatprep.mubr.bf16.mxu0 0
      %1644 = vmatmul.mubr.bf16.gmra.mrb[0].mxu0 %v1586
      %v1645 = vpop.f32.mrb[0].mxu0
      %v1646 = vadd.f32 0.0, %v1645
      %v1647 = vpop.f32.mrb[0].mxu0
      %v1648 = vpop.f32.mrb[0].mxu0
      %v1649 = vadd.f32 0.0, %v1648
      %v1650 = vpop.f32.mrb[0].mxu0
      %1651 = vmatprep.mubr.bf16.mxu0 0
      %1652 = vmatmul.mubr.bf16.gmra.mrb[0].mxu0 %v1589
      %v1653 = vpop.f32.mrb[0].mxu0
      %v1654 = vadd.f32 0.0, %v1653
      %v1655 = vpop.f32.mrb[0].mxu0
      %v1656 = vpop.f32.mrb[0].mxu0
      %v1657 = vadd.f32 0.0, %v1656
      %v1658 = vpop.f32.mrb[0].mxu0
      %1659 = vdwg.mxu0
      %v1663 = vunpack.c.l.b16 %v1546
      %v1664 = vunpack.c.l.b16 %v1547
      %v1665 = vunpack.c.l.b16 %v1548
      %v1666 = vpack.c.b16 %v1664, %v1663
      %v1667 = vpack.c.b16 %v1665, %v1665
      %v1670 = vsel %vm1578, %v1542, 0
      %v1673 = vsel %vm1578, %v1543, 0
      %v1676 = vsel %vm1578, %v1544, 0
      %v1679 = vsel %vm1578, %v1545, 0
      %v1682 = vsel %vm1591, %v1667, 0
      %1684 = vmatprep.subr.bf16.mxu0 0
      %1685 = vmatpush1.bf16.msra.mxu0 %v1666
      %1686 = vmatprep.subr.bf16.mxu0 0
      %1687 = vmatpush1.bf16.msra.mxu0 %v1682
      %1688 = vmatprep.subr.bf16.mxu0 0
      %1689 = vmatpush1.bf16.msra.mxu0 0
      %1690 = vmatprep.subr.bf16.mxu0 0
      %1691 = vmatpush1.bf16.msra.mxu0 0
      %1692 = vmatprep.subr.bf16.mxu0 0
      %1693 = vmatpush1.bf16.msra.mxu0 0
      %1694 = vmatprep.subr.bf16.mxu0 0
      %1695 = vmatpush1.bf16.msra.mxu0 0
      %1696 = vmatprep.subr.bf16.mxu0 0
      %1697 = vmatpush1.bf16.msra.mxu0 0
      %1698 = vmatprep.subr.bf16.mxu0 0
      %1699 = vmatpush1.bf16.msra.mxu0 0
      %1700 = vmatprep.subr.bf16.mxu0 0
      %1701 = vmatpush1.bf16.msra.mxu0 0
      %1702 = vmatprep.subr.bf16.mxu0 0
      %1703 = vmatpush1.bf16.msra.mxu0 0
      %1704 = vmatprep.subr.bf16.mxu0 0
      %1705 = vmatpush1.bf16.msra.mxu0 0
      %1706 = vmatprep.subr.bf16.mxu0 0
      %1707 = vmatpush1.bf16.msra.mxu0 0
      %1708 = vmatprep.subr.bf16.mxu0 0
      %1709 = vmatpush1.bf16.msra.mxu0 0
      %1710 = vmatprep.subr.bf16.mxu0 0
      %1711 = vmatpush1.bf16.msra.mxu0 0
      %1712 = vmatprep.subr.bf16.mxu0 0
      %1713 = vmatpush1.bf16.msra.mxu0 0
      %1714 = vmatprep.subr.bf16.mxu0 0
      %1715 = vmatpush1.bf16.msra.mxu0 0
      %1716 = vmatprep.mubr.bf16.mxu0 0
      %1717 = vmatmul.mubr.bf16.gmra.mrb[0].mxu0 %v1670
      %v1718 = vpop.f32.mrb[0].mxu0
      %v1719 = vadd.f32 %v1630, %v1718
      %v1720 = vpop.f32.mrb[0].mxu0
      %v1721 = vpop.f32.mrb[0].mxu0
      %v1722 = vadd.f32 %v1633, %v1721
      %v1723 = vpop.f32.mrb[0].mxu0
      %1724 = vmatprep.mubr.bf16.mxu0 0
      %1725 = vmatmul.mubr.bf16.gmra.mrb[0].mxu0 %v1673
      %v1726 = vpop.f32.mrb[0].mxu0
      %v1727 = vadd.f32 %v1638, %v1726
      %v1728 = vpop.f32.mrb[0].mxu0
      %v1729 = vpop.f32.mrb[0].mxu0
      %v1730 = vadd.f32 %v1641, %v1729
      %v1731 = vpop.f32.mrb[0].mxu0
      %1732 = vmatprep.mubr.bf16.mxu0 0
      %1733 = vmatmul.mubr.bf16.gmra.mrb[0].mxu0 %v1676
      %v1734 = vpop.f32.mrb[0].mxu0
      %v1735 = vadd.f32 %v1646, %v1734
      %v1736 = vpop.f32.mrb[0].mxu0
      %v1737 = vpop.f32.mrb[0].mxu0
      %v1738 = vadd.f32 %v1649, %v1737
      %v1739 = vpop.f32.mrb[0].mxu0
      %1740 = vmatprep.mubr.bf16.mxu0 0
      %1741 = vmatmul.mubr.bf16.gmra.mrb[0].mxu0 %v1679
      %v1742 = vpop.f32.mrb[0].mxu0
      %v1743 = vadd.f32 %v1654, %v1742
      %v1744 = vpop.f32.mrb[0].mxu0
      %v1745 = vpop.f32.mrb[0].mxu0
      %v1746 = vadd.f32 %v1657, %v1745
      %v1747 = vpop.f32.mrb[0].mxu0
      %1748 = vdwg.mxu0
      %v1749 = vld [vmem:[#allocation3 + $0x20] sm:$0xff]
      %s1750 = scalar_lea.vmem %s4, 24
      %v1751 = vld [vmem:[%s1750] sm:$0xf]
      %v1752 = vld [vmem:[%s1750 + $0x4] sm:$0xf]
      %v1753 = vld [vmem:[%s1750 + $0x8] sm:$0xf]
      %v1757 = vunpack.c.l.b16 %v1751
      %v1758 = vunpack.c.l.b16 %v1752
      %v1759 = vunpack.c.l.b16 %v1753
      %v1760 = vpack.c.b16 %v1758, %v1757
      %v1761 = vpack.c.b16 %v1759, %v1759
      %v1764 = vsel %vm1578, %v1749, 0
      %v1767 = vsel %vm1591, %v1761, 0
      %1769 = vmatprep.subr.bf16.mxu0 0
      %1770 = vmatpush1.bf16.msra.mxu0 %v1760
      %1771 = vmatprep.subr.bf16.mxu0 0
      %1772 = vmatpush1.bf16.msra.mxu0 %v1767
      %1773 = vmatprep.subr.bf16.mxu0 0
      %1774 = vmatpush1.bf16.msra.mxu0 0
      %1775 = vmatprep.subr.bf16.mxu0 0
      %1776 = vmatpush1.bf16.msra.mxu0 0
      %1777 = vmatprep.subr.bf16.mxu0 0
      %1778 = vmatpush1.bf16.msra.mxu0 0
      %1779 = vmatprep.subr.bf16.mxu0 0
      %1780 = vmatpush1.bf16.msra.mxu0 0
      %1781 = vmatprep.subr.bf16.mxu0 0
      %1782 = vmatpush1.bf16.msra.mxu0 0
      %1783 = vmatprep.subr.bf16.mxu0 0
      %1784 = vmatpush1.bf16.msra.mxu0 0
      %1785 = vmatprep.subr.bf16.mxu0 0
      %1786 = vmatpush1.bf16.msra.mxu0 0
      %1787 = vmatprep.subr.bf16.mxu0 0
      %1788 = vmatpush1.bf16.msra.mxu0 0
      %1789 = vmatprep.subr.bf16.mxu0 0
      %1790 = vmatpush1.bf16.msra.mxu0 0
      %1791 = vmatprep.subr.bf16.mxu0 0
      %1792 = vmatpush1.bf16.msra.mxu0 0
      %1793 = vmatprep.subr.bf16.mxu0 0
      %1794 = vmatpush1.bf16.msra.mxu0 0
      %1795 = vmatprep.subr.bf16.mxu0 0
      %1796 = vmatpush1.bf16.msra.mxu0 0
      %1797 = vmatprep.subr.bf16.mxu0 0
      %1798 = vmatpush1.bf16.msra.mxu0 0
      %1799 = vmatprep.subr.bf16.mxu0 0
      %1800 = vmatpush1.bf16.msra.mxu0 0
      %1801 = vmatprep.mubr.bf16.mxu0 0
      %1802 = vmatmul.mubr.bf16.gmra.mrb[0].mxu0 %v1673
      %v1803 = vpop.f32.mrb[0].mxu0
      %v1804 = vadd.f32 0.0, %v1803
      %v1805 = vpop.f32.mrb[0].mxu0
      %v1806 = vpop.f32.mrb[0].mxu0
      %v1807 = vadd.f32 0.0, %v1806
      %v1808 = vpop.f32.mrb[0].mxu0
      %1809 = vmatprep.mubr.bf16.mxu0 0
      %1810 = vmatmul.mubr.bf16.gmra.mrb[0].mxu0 %v1676
      %v1811 = vpop.f32.mrb[0].mxu0
      %v1812 = vadd.f32 0.0, %v1811
      %v1813 = vpop.f32.mrb[0].mxu0
      %v1814 = vpop.f32.mrb[0].mxu0
      %v1815 = vadd.f32 0.0, %v1814
      %v1816 = vpop.f32.mrb[0].mxu0
      %1817 = vmatprep.mubr.bf16.mxu0 0
      %1818 = vmatmul.mubr.bf16.gmra.mrb[0].mxu0 %v1679
      %v1819 = vpop.f32.mrb[0].mxu0
      %v1820 = vadd.f32 0.0, %v1819
      %v1821 = vpop.f32.mrb[0].mxu0
      %v1822 = vpop.f32.mrb[0].mxu0
      %v1823 = vadd.f32 0.0, %v1822
      %v1824 = vpop.f32.mrb[0].mxu0
      %1825 = vmatprep.mubr.bf16.mxu0 0
      %1826 = vmatmul.mubr.bf16.gmra.mrb[0].mxu0 %v1764
      %v1827 = vpop.f32.mrb[0].mxu0
      %v1828 = vadd.f32 0.0, %v1827
      %v1829 = vpop.f32.mrb[0].mxu0
      %v1830 = vpop.f32.mrb[0].mxu0
      %v1831 = vadd.f32 0.0, %v1830
      %v1832 = vpop.f32.mrb[0].mxu0
      %1833 = vdwg.mxu0
      %v1834 = vadd.f32 %v1719, %v1804
      %v1835 = vadd.f32 %v1722, %v1807
      %v1836 = vadd.f32 %v1727, %v1812
      %v1837 = vadd.f32 %v1730, %v1815
      %v1838 = vadd.f32 %v1735, %v1820
      %v1839 = vadd.f32 %v1738, %v1823
      %v1840 = vadd.f32 %v1743, %v1828
      %v1841 = vadd.f32 %v1746, %v1831
      %v1842 = vld [vmem:[%s5] sm:$0x1]
      %v1844 = vlaneseq
      %v1845 = vshrl.u32 %v1844, 7
      %v1846 = vsub.s32 0, %v1845
      %v1847 = vrot.slane %v1842, %v1846
      %v1849 = vmul.f32 %v1834, %v1847
      %v1850 = vmul.f32 %v1835, %v1847
      %v1851 = vmul.f32 %v1836, %v1847
      %v1852 = vmul.f32 %v1837, %v1847
      %v1853 = vmul.f32 %v1838, %v1847
      %v1854 = vmul.f32 %v1839, %v1847
      %v1855 = vmul.f32 %v1840, %v1847
      %v1856 = vmul.f32 %v1841, %v1847
      %v1857 = vld [vmem:[%s6] sm:$0x1]
      %v1859 = vlaneseq
      %v1860 = vshrl.u32 %v1859, 7
      %v1861 = vsub.s32 0, %v1860
      %v1862 = vrot.slane %v1857, %v1861
      %v1864 = vadd.f32 %v1849, %v1862
      %v1865 = vadd.f32 %v1850, %v1862
      %v1866 = vadd.f32 %v1851, %v1862
      %v1867 = vadd.f32 %v1852, %v1862
      %v1868 = vadd.f32 %v1853, %v1862
      %v1869 = vadd.f32 %v1854, %v1862
      %v1870 = vadd.f32 %v1855, %v1862
      %v1871 = vadd.f32 %v1856, %v1862
      %v1872 = vmax.f32 %v1864, 0.0
      %v1873 = vmax.f32 %v1865, 0.0
      %v1874 = vmax.f32 %v1866, 0.0
      %v1875 = vmax.f32 %v1867, 0.0
      %v1876 = vmax.f32 %v1868, 0.0
      %v1877 = vmax.f32 %v1869, 0.0
      %v1878 = vmax.f32 %v1870, 0.0
      %v1879 = vmax.f32 %v1871, 0.0
      %1880 = vst.msk [vmem:[%s314] sm:$0xff] %vm1320, %v1872
      %1881 = vst.msk [vmem:[%s314 + $0x8] sm:$0xff] %vm1320, %v1873
      %1882 = vst.msk [vmem:[%s314 + $0x10] sm:$0xff] %vm1320, %v1874
      %1883 = vst.msk [vmem:[%s314 + $0x18] sm:$0xff] %vm1320, %v1875
      %1884 = vst.msk [vmem:[%s314 + $0x20] sm:$0xff] %vm1320, %v1876
      %1885 = vst.msk [vmem:[%s314 + $0x28] sm:$0xff] %vm1320, %v1877
      %1886 = vst.msk [vmem:[%s314 + $0x30] sm:$0xff] %vm1320, %v1878
      %1887 = vst.msk [vmem:[%s314 + $0x38] sm:$0xff] %vm1320, %v1879
      %s1888 = smul.u32 8, %s23
      %p1889 = scmp.lt.s32.totalorder %s22, 1
      %s1890 = scalar_select %p1889, %s22, 1
      %p1891 = scmp.lt.s32.totalorder %s1888, 7
      %s1892 = scalar_select %p1891, %s1888, 7
      %s1893 = smul.addr %s1890, 8
      %s1894 = sadd.s32 %s1892, %s1893
      %s1895 = smul.addr %s1894, 8
      %s1896 = scalar_lea.vmem %s7, %s1895
      // Predicated region
      $region53: #{tpu_custom_call.1} parent=47 // pred_check
        %p1897 = pneg %p204
      $region54: #{tpu_custom_call.1} parent=47 // pred_check_branch
        %1899 = sbr.rel (%p1897) target = $region56
      $region55: #{tpu_custom_call.1} parent=47 // pred_region
        %s1900 = smul.u32 8, %s23
      $region56: #{tpu_custom_call.1} parent=47 // pred_fallthru
        _
    $region48: #{tpu_custom_call.1} parent=5 // pred_fallthru
      _
    %p1901 = scmp.le.s32.totalorder 2, %s13
    // Predicated region
    $region57: #{tpu_custom_call.1} parent=5 // pred_check
      %p1902 = pneg %p1901
    $region58: #{tpu_custom_call.1} parent=5 // pred_check_branch
      %1904 = sbr.rel (%p1902) target = $region60
    $region59: #{tpu_custom_call.1} parent=5 // pred_region
      %s1905 = ssub.s32 %s13, 2
      // Predicated region
      $region61: #{tpu_custom_call.1} parent=59 // pred_check
        %p1906 = pneg %p210
      $region62: #{tpu_custom_call.1} parent=59 // pred_check_branch
        %1908 = sbr.rel (%p1906) target = $region64
      $region63: #{tpu_custom_call.1} parent=59 // pred_region
        %s1909 = smul.u32 8, %s25
        %p1910 = scmp.lt.s32.totalorder %s24, 1
        %s1911 = scalar_select %p1910, %s24, 1
        %p1912 = scmp.lt.s32.totalorder %s1909, 7
        %s1913 = scalar_select %p1912, %s1909, 7
        %s1914 = smul.addr %s1911, 8
        %s1915 = sadd.s32 %s1913, %s1914
        %s1916 = smul.addr %s1915, 8
        %s1917 = scalar_lea.vmem %s7, %s1916
      $region64: #{tpu_custom_call.1} parent=59 // pred_fallthru
        _
    $region60: #{tpu_custom_call.1} parent=5 // pred_fallthru
      _
  $region6: #{tpu_custom_call.1} parent=0 // loop_footer
    %s17 = sadd.s32 1, %s13
  $region7: #{tpu_custom_call.1} parent=0 // loop_footer_branch
    %12 = sbr.rel target = $region3
  $region8: #{tpu_custom_call.1} parent=0 // loop_exit
    _

</llo_original>
